<compile_context>
chip_gen: v7x
topology: tpu7x:2x2x1
jax: 0.10.0
libtpu: 0.0.40
codegen_flags: <defaults>
</compile_context>

<pallas_src>
import functools

import jax
import jax.numpy as jnp
from jax.experimental import pallas as pl
from jax.experimental.pallas import tpu as pltpu

BN_EPS_2D = 1e-3   # torchvision EfficientNet BatchNorm2d eps
BN_EPS_1D = 1e-5   # nn.BatchNorm1d default eps
OUT_PAD = 128      # lane-dense padded width for the final (B, 2) output
ACC_ROWS = 8       # sublane-parallel pool accumulator rows


def _device_kind():
    try:
        return jax.devices()[0].device_kind.lower()
    except Exception:
        return ""


_KIND = _device_kind()
_IS_V5 = "v5" in _KIND
_IS_V7 = "v7" in _KIND

# bf16 EUP exists on v6e/v7x; v5e would only pay conversion cost.
USE_BF16_SIGMOID = not _IS_V5
if _IS_V7:
    MAX_TILE_HW, VMEM_LIMIT = 1024, 48 << 20       # 64 MiB physical VMEM
elif ("v5" in _KIND) or ("v6" in _KIND):
    MAX_TILE_HW, VMEM_LIMIT = 2048, 96 << 20       # 128 MiB physical VMEM
else:
    MAX_TILE_HW, VMEM_LIMIT = 1024, 48 << 20       # conservative default


def _round_up(x, m):
    return ((x + m - 1) // m) * m


def _pick_tile(total, max_tile, align=8):
    """Largest tile <= max_tile that evenly divides `total` (multiple of `align`
    unless the full extent is used)."""
    if total <= max_tile:
        return total
    for d in range(max_tile, 0, -1):
        if total % d == 0 and d % align == 0:
            return d
    return total  # fall back to a single full block (always legal)


# ----------------------------- Pallas kernels ------------------------------

def _backbone_pool_kernel(x_ref, sw_ref, sb_ref, hw_ref, hb_ref, cw_ref, cb_ref,
                          o_ref, acc_ref, *, inv_hw, bf16_sigmoid, strip_acc):
    """Fused: stem conv (as matmul, BN folded) + SiLU -> 1x1 head conv (BN
    folded) + SiLU -> global average pool -> cls Linear(1280, h1_pad),
    accumulated per image.

    grid = (image, hw_tile); x_ref: (1, T, K_pad) bf16; sw_ref: (K_pad, 32) bf16;
    hw_ref: (32, 1280) bf16; cw_ref: (1280, h1_pad) bf16; biases f32.
    acc_ref: (8, 1280) f32 VMEM scratch; o_ref: (1, 1, h1_pad) f32.
    """
    j = pl.program_id(1)

    @pl.when(j == 0)
    def _init():
        acc_ref[...] = jnp.zeros_like(acc_ref)

    x = x_ref[0]                                                   # (T, K_pad)
    y = jnp.dot(x, sw_ref[...], preferred_element_type=jnp.float32) + sb_ref[...]
    y = y * jax.nn.sigmoid(y)                                      # SiLU (T, 32)
    y = jnp.dot(y.astype(jnp.bfloat16), hw_ref[...],
                preferred_element_type=jnp.float32) + hb_ref[...]  # (T, 1280)
    if bf16_sigmoid:
        sig = jax.nn.sigmoid(y.astype(jnp.bfloat16)).astype(jnp.float32)
    else:
        sig = jax.nn.sigmoid(y)
    y = y * sig                                                    # SiLU (T, 1280)

    if strip_acc:
        # Sublane-parallel accumulation: pure VPU adds, no per-tile XLU reduce.
        acc_ref[...] += jnp.sum(
            y.reshape(-1, ACC_ROWS, y.shape[-1]), axis=0)
    else:
        acc_ref[0:1, :] += jnp.sum(y, axis=0, keepdims=True)

    @pl.when(j == pl.num_programs(1) - 1)
    def _finalize():
        pooled = jnp.sum(acc_ref[...], axis=0, keepdims=True) * inv_hw  # (1,1280)
        feats = jnp.dot(pooled.astype(jnp.bfloat16), cw_ref[...],
                        preferred_element_type=jnp.float32) + cb_ref[...]
        o_ref[...] = feats.reshape(o_ref.shape)


def _head_kernel(f_ref, w1a_ref, w1b_ref, b1_ref, w2_ref, b2_ref,
                 w3_ref, b3_ref, o_ref, *, n_imgs):
    """Fused MLP head: feature concat folded into split fc1 weights
    (fc1(cat[f1,f2]) == f1 @ w1[:h1] + f2 @ w1[h1:]), fc1+bn1+relu,
    (dropout=id), fc2+bn2+relu, outlayer. Output lane-dense (N, OUT_PAD)."""
    f = f_ref[...].astype(jnp.bfloat16)                            # (2N, h1_pad)
    f1 = f[:n_imgs]
    f2 = f[n_imgs:]
    x = (jnp.dot(f1, w1a_ref[...], preferred_element_type=jnp.float32)
         + jnp.dot(f2, w1b_ref[...], preferred_element_type=jnp.float32)
         + b1_ref[...])
    x = jnp.maximum(x, 0.0)
    # Dropout1d(p=0.3): identity in eval mode
    x = jnp.dot(x.astype(jnp.bfloat16), w2_ref[...],
                preferred_element_type=jnp.float32) + b2_ref[...]
    x = jnp.maximum(x, 0.0)
    o_ref[...] = jnp.dot(x.astype(jnp.bfloat16), w3_ref[...],
                         preferred_element_type=jnp.float32) + b3_ref[...]


# --------------------------- pallas_call wrappers ---------------------------

def pallas_backbone_pool(patches, ip):
    """patches: (2N, HW, K_pad) bf16 -> per-image features (2N, h1_pad) f32."""
    n_imgs, hw, k_pad = patches.shape
    stem_ch = ip["stem_w"].shape[1]
    feat_ch = ip["headc_w"].shape[1]
    h1_pad = ip["cls_w"].shape[1]
    tile_hw = _pick_tile(hw, MAX_TILE_HW)
    grid = (n_imgs, hw // tile_hw)
    kernel = functools.partial(
        _backbone_pool_kernel,
        inv_hw=1.0 / float(hw),
        bf16_sigmoid=USE_BF16_SIGMOID,
        strip_acc=(tile_hw % ACC_ROWS == 0),
    )

    flops = (2 * n_imgs * hw * (k_pad * stem_ch + stem_ch * feat_ch)
             + 2 * n_imgs * feat_ch * h1_pad)
    transcendentals = n_imgs * hw * (stem_ch + feat_ch)
    weight_bytes = sum(
        int(ip[k].size) * ip[k].dtype.itemsize
        for k in ("stem_w", "stem_b", "headc_w", "headc_b", "cls_w", "cls_b"))
    bytes_accessed = (int(patches.size) * patches.dtype.itemsize
                      + n_imgs * h1_pad * 4 + weight_bytes)

    out = pl.pallas_call(
        kernel,
        out_shape=jax.ShapeDtypeStruct((n_imgs, 1, h1_pad), jnp.float32),
        grid_spec=pltpu.PrefetchScalarGridSpec(
            num_scalar_prefetch=0,
            grid=grid,
            in_specs=[
                pl.BlockSpec((1, tile_hw, k_pad), lambda i, j: (i, j, 0)),
                pl.BlockSpec((k_pad, stem_ch), lambda i, j: (0, 0)),
                pl.BlockSpec((1, stem_ch), lambda i, j: (0, 0)),
                pl.BlockSpec((stem_ch, feat_ch), lambda i, j: (0, 0)),
                pl.BlockSpec((1, feat_ch), lambda i, j: (0, 0)),
                pl.BlockSpec((feat_ch, h1_pad), lambda i, j: (0, 0)),
                pl.BlockSpec((1, h1_pad), lambda i, j: (0, 0)),
            ],
            out_specs=pl.BlockSpec((1, 1, h1_pad), lambda i, j: (i, 0, 0)),
            scratch_shapes=[pltpu.VMEM((ACC_ROWS, feat_ch), jnp.float32)],
        ),
        compiler_params=pltpu.CompilerParams(
            dimension_semantics=("parallel", "arbitrary"),
            vmem_limit_bytes=VMEM_LIMIT),
        cost_estimate=pl.CostEstimate(
            flops=flops, transcendentals=transcendentals,
            bytes_accessed=bytes_accessed),
    )(patches, ip["stem_w"], ip["stem_b"], ip["headc_w"], ip["headc_b"],
      ip["cls_w"], ip["cls_b"])
    return out.reshape(n_imgs, h1_pad)


def pallas_head(feats, ip, n):
    """feats: (2N, h1_pad) f32 -> (N, OUT_PAD) f32 (slice [:, :2] outside)."""
    kernel = functools.partial(_head_kernel, n_imgs=n)
    return pl.pallas_call(
        kernel,
        out_shape=jax.ShapeDtypeStruct((n, OUT_PAD), jnp.float32),
    )(feats, ip["w1a"], ip["w1b"], ip["b1"], ip["w2"], ip["b2"],
      ip["w3"], ip["b3"])


# ------------------------------ glue (JAX) ----------------------------------

def im2col_padded(x, k=3, stride=2, pad=1, k_align=8):
    """x: (N, H, W, C) NHWC -> patches (N, Ho*Wo, K_pad), K zero-padded."""
    N, H, W, C = x.shape
    xp = jnp.pad(x, ((0, 0), (pad, pad), (pad, pad), (0, 0)))
    Ho = (H + 2 * pad - k) // stride + 1
    Wo = (W + 2 * pad - k) // stride + 1
    cols = []
    for dy in range(k):
        for dx in range(k):
            cols.append(xp[:, dy:dy + stride * Ho:stride,
                           dx:dx + stride * Wo:stride, :])
    patches = jnp.concatenate(cols, axis=-1)           # (N, Ho, Wo, k*k*C)
    K = k * k * C
    K_pad = _round_up(K, k_align)
    if K_pad != K:
        patches = jnp.pad(patches, ((0, 0), (0, 0), (0, 0), (0, K_pad - K)))
    return patches.reshape(N, Ho * Wo, K_pad), Ho, Wo


def make_params(key, hidden1, hidden2, in_ch=3, stem_ch=32, feat_ch=1280):
    """Raw (unfolded) parameters mirroring the PyTorch module structure."""
    ks = jax.random.split(key, 8)
    s = lambda k, shape, scale: jax.random.normal(k, shape, jnp.float32) * scale
    p = {}
    # surrogate EfficientNet backbone
    p["stem_w"] = s(ks[0], (3 * 3 * in_ch, stem_ch), 0.1)
    p["stem_g"] = jnp.ones((1, stem_ch), jnp.float32)
    p["stem_be"] = jnp.zeros((1, stem_ch), jnp.float32)
    p["stem_m"] = jnp.zeros((1, stem_ch), jnp.float32)
    p["stem_v"] = jnp.ones((1, stem_ch), jnp.float32)
    p["headc_w"] = s(ks[1], (stem_ch, feat_ch), 0.1)
    p["headc_g"] = jnp.ones((1, feat_ch), jnp.float32)
    p["headc_be"] = jnp.zeros((1, feat_ch), jnp.float32)
    p["headc_m"] = jnp.zeros((1, feat_ch), jnp.float32)
    p["headc_v"] = jnp.ones((1, feat_ch), jnp.float32)
    # replaced classifier: Linear(1280, hidden1)
    p["cls_w"] = s(ks[2], (feat_ch, hidden1), 0.03)
    p["cls_b"] = jnp.zeros((1, hidden1), jnp.float32)
    # MLP head
    p["w1"] = s(ks[3], (2 * hidden1, hidden2), 0.1)
    p["b1"] = jnp.zeros((1, hidden2), jnp.float32)
    p["g1"] = jnp.ones((1, hidden2), jnp.float32)
    p["be1"] = jnp.zeros((1, hidden2), jnp.float32)
    p["m1"] = jnp.zeros((1, hidden2), jnp.float32)
    p["v1"] = jnp.ones((1, hidden2), jnp.float32)
    p["w2"] = s(ks[4], (hidden2, hidden2), 0.1)
    p["b2"] = jnp.zeros((1, hidden2), jnp.float32)
    p["g2"] = jnp.ones((1, hidden2), jnp.float32)
    p["be2"] = jnp.zeros((1, hidden2), jnp.float32)
    p["m2"] = jnp.zeros((1, hidden2), jnp.float32)
    p["v2"] = jnp.ones((1, hidden2), jnp.float32)
    p["w3"] = s(ks[5], (hidden2, 2), 0.1)
    p["b3"] = jnp.zeros((1, 2), jnp.float32)
    return p


def prepare_inference_params(p, hidden1, k_pad):
    """Fold BatchNorm into weights/bias, pad for alignment / lane density,
    cast all matmul weights to bf16 (biases stay f32)."""
    ip = {}
    h1_pad = _round_up(hidden1, 128)
    # stem conv (bias-free) + BN2d folded; contraction dim padded to k_pad
    s = p["stem_g"] / jnp.sqrt(p["stem_v"] + BN_EPS_2D)
    w = p["stem_w"] * s
    w = jnp.pad(w, ((0, k_pad - w.shape[0]), (0, 0)))
    ip["stem_w"] = w.astype(jnp.bfloat16)
    ip["stem_b"] = (p["stem_be"] - p["stem_m"] * s).astype(jnp.float32)
    # 1x1 head conv (bias-free) + BN2d folded
    s = p["headc_g"] / jnp.sqrt(p["headc_v"] + BN_EPS_2D)
    ip["headc_w"] = (p["headc_w"] * s).astype(jnp.bfloat16)
    ip["headc_b"] = (p["headc_be"] - p["headc_m"] * s).astype(jnp.float32)
    # replaced classifier, padded to a lane-dense width (fused into backbone)
    ip["cls_w"] = jnp.pad(p["cls_w"],
                          ((0, 0), (0, h1_pad - hidden1))).astype(jnp.bfloat16)
    ip["cls_b"] = jnp.pad(p["cls_b"],
                          ((0, 0), (0, h1_pad - hidden1))).astype(jnp.float32)
    # fc1 + bn1 folded; split for the concat-free head; rows padded to h1_pad
    s1 = p["g1"] / jnp.sqrt(p["v1"] + BN_EPS_1D)
    w1 = p["w1"] * s1
    ip["w1a"] = jnp.pad(w1[:hidden1],
                        ((0, h1_pad - hidden1), (0, 0))).astype(jnp.bfloat16)
    ip["w1b"] = jnp.pad(w1[hidden1:],
                        ((0, h1_pad - hidden1), (0, 0))).astype(jnp.bfloat16)
    ip["b1"] = ((p["b1"] - p["m1"]) * s1 + p["be1"]).astype(jnp.float32)
    # fc2 + bn2 folded
    s2 = p["g2"] / jnp.sqrt(p["v2"] + BN_EPS_1D)
    ip["w2"] = (p["w2"] * s2).astype(jnp.bfloat16)
    ip["b2"] = ((p["b2"] - p["m2"]) * s2 + p["be2"]).astype(jnp.float32)
    # outlayer, zero-padded to a lane-dense output width
    ip["w3"] = jnp.pad(p["w3"],
                       ((0, 0), (0, OUT_PAD - p["w3"].shape[1]))).astype(jnp.bfloat16)
    ip["b3"] = jnp.pad(p["b3"],
                       ((0, 0), (0, OUT_PAD - p["b3"].shape[1]))).astype(jnp.float32)
    return ip


@jax.jit
def pretrain_model_forward(x1, x2, ip):
    n = x1.shape[0]
    # process both image stacks in one batched backbone pass (2N images)
    x = jnp.concatenate([x1, x2], axis=0)                     # (2N, C, H, W)
    # NCHW -> NHWC, cast to bf16 BEFORE im2col so the materialized patches
    # array in HBM is half-width (biggest win on v5e's ~0.8 TB/s HBM).
    x = jnp.transpose(x, (0, 2, 3, 1)).astype(jnp.bfloat16)
    patches, _, _ = im2col_padded(x, k=3, stride=2, pad=1)    # (2N, HW, K_pad)
    feats = pallas_backbone_pool(patches, ip)                 # (2N, h1_pad)
    out_pad = pallas_head(feats, ip, n)                       # (N, OUT_PAD)
    return out_pad[:, :2]                                     # (N, 2)


if __name__ == "__main__":
    key = jax.random.PRNGKey(0)
    k_p, k_x1, k_x2 = jax.random.split(key, 3)

    hidden_size1, hidden_size2 = 32, 32
    batch, channels, spatial = 2, 3, 16

    raw_params = make_params(k_p, hidden_size1, hidden_size2, in_ch=channels)
    k_pad = _round_up(3 * 3 * channels, 8)
    params = prepare_inference_params(raw_params, hidden_size1, k_pad)

    x1 = jax.random.normal(k_x1, (batch, channels, spatial, spatial), jnp.float32)
    x2 = jax.random.normal(k_x2, (batch, channels, spatial, spatial), jnp.float32)

    out = pretrain_model_forward(x1, x2, params)
    jax.block_until_ready(out)
    assert out.shape == (batch, 2) and out.dtype == jnp.float32
    print("KERNEL_OK")
</pallas_src>

<mosaic_0001>
module attributes {stable_mosaic.version = 11 : i64} {
  func.func @_backbone_pool_kernel(%arg0: i32, %arg1: i32, %arg2: memref<1x64x32xbf16, #tpu.memory_space<vmem>>, %arg3: memref<32x32xbf16, #tpu.memory_space<vmem>>, %arg4: memref<1x32xf32, #tpu.memory_space<vmem>>, %arg5: memref<32x1280xbf16, #tpu.memory_space<vmem>>, %arg6: memref<1x1280xf32, #tpu.memory_space<vmem>>, %arg7: memref<1280x128xbf16, #tpu.memory_space<vmem>>, %arg8: memref<1x128xf32, #tpu.memory_space<vmem>>, %arg9: memref<1x1x128xf32, #tpu.memory_space<vmem>>, %arg10: memref<8x1280xf32, #tpu.memory_space<vmem>>) attributes {dimension_semantics = [#tpu.dimension_semantics<parallel>, #tpu.dimension_semantics<arbitrary>], iteration_bounds = array<i64: 4, 1>, scalar_prefetch = 0 : i64, scratch_operands = 1 : i64, tpu.core_type = #tpu.core_type<tc>, window_params = [{transform_indices = @transform_0, window_bounds = array<i64: 1, 64, 32>}, {pipeline_mode = #tpu.pipeline_mode<synchronous>, transform_indices = @transform_1, window_bounds = array<i64: 32, 32>}, {pipeline_mode = #tpu.pipeline_mode<synchronous>, transform_indices = @transform_2, window_bounds = array<i64: 1, 32>}, {pipeline_mode = #tpu.pipeline_mode<synchronous>, transform_indices = @transform_3, window_bounds = array<i64: 32, 1280>}, {pipeline_mode = #tpu.pipeline_mode<synchronous>, transform_indices = @transform_4, window_bounds = array<i64: 1, 1280>}, {pipeline_mode = #tpu.pipeline_mode<synchronous>, transform_indices = @transform_5, window_bounds = array<i64: 1280, 128>}, {pipeline_mode = #tpu.pipeline_mode<synchronous>, transform_indices = @transform_6, window_bounds = array<i64: 1, 128>}, {transform_indices = @transform_7, window_bounds = array<i64: 1, 1, 128>}]} {
    %c0_i32 = arith.constant 0 : i32
    %0 = arith.cmpi eq, %arg1, %c0_i32 : i32
    %1 = arith.extui %0 : i1 to i32
    %c0_i32_0 = arith.constant 0 : i32
    %2 = arith.cmpi ne, %1, %c0_i32_0 : i32
    scf.if %2 {
      %cst_21 = arith.constant 0.000000e+00 : f32
      %38 = vector.broadcast %cst_21 : f32 to vector<8x1280xf32>
      %c0_22 = arith.constant 0 : index
      %c0_23 = arith.constant 0 : index
      %39 = vector.load %arg10[%c0_22, %c0_23] : memref<8x1280xf32, #tpu.memory_space<vmem>>, vector<8x1280xf32>
      tpu.vector_store %arg10[%c0_22, %c0_23], %38 {strides = array<i32>} : memref<8x1280xf32, #tpu.memory_space<vmem>>, vector<8x1280xf32>,
    } else {
    }
    %c0 = arith.constant 0 : index
    %c0_1 = arith.constant 0 : index
    %c0_2 = arith.constant 0 : index
    %3 = vector.load %arg2[%c0, %c0_1, %c0_2] : memref<1x64x32xbf16, #tpu.memory_space<vmem>>, vector<1x64x32xbf16>
    %4 = vector.shape_cast %3 : vector<1x64x32xbf16> to vector<64x32xbf16>
    %c0_3 = arith.constant 0 : index
    %c0_4 = arith.constant 0 : index
    %5 = vector.load %arg3[%c0_3, %c0_4] : memref<32x32xbf16, #tpu.memory_space<vmem>>, vector<32x32xbf16>
    %cst = arith.constant dense<0.000000e+00> : vector<64x32xf32>
    %6 = tpu.matmul %4, %5, %cst {dimension_numbers = #tpu.dot_dimension_numbers<[1], [0], [0], [1], [0, 0, 1, 1], [], []>} : vector<64x32xbf16>, vector<32x32xbf16>, vector<64x32xf32> -> vector<64x32xf32>
    %c0_5 = arith.constant 0 : index
    %c0_6 = arith.constant 0 : index
    %7 = vector.load %arg4[%c0_5, %c0_6] : memref<1x32xf32, #tpu.memory_space<vmem>>, vector<1x32xf32>
    %8 = vector.broadcast %7 : vector<1x32xf32> to vector<64x32xf32>
    %9 = arith.addf %6, %8 : vector<64x32xf32>
    %10 = arith.negf %9 : vector<64x32xf32>
    %11 = math.exp %10 : vector<64x32xf32>
    %cst_7 = arith.constant 1.000000e+00 : f32
    %12 = vector.broadcast %cst_7 : f32 to vector<64x32xf32>
    %13 = arith.addf %12, %11 : vector<64x32xf32>
    %14 = arith.divf %12, %13 : vector<64x32xf32>
    %15 = arith.mulf %9, %14 : vector<64x32xf32>
    %16 = arith.truncf %15 : vector<64x32xf32> to vector<64x32xbf16>
    %c0_8 = arith.constant 0 : index
    %c0_9 = arith.constant 0 : index
    %17 = vector.load %arg5[%c0_8, %c0_9] : memref<32x1280xbf16, #tpu.memory_space<vmem>>, vector<32x1280xbf16>
    %cst_10 = arith.constant dense<0.000000e+00> : vector<64x1280xf32>
    %18 = tpu.matmul %16, %17, %cst_10 {dimension_numbers = #tpu.dot_dimension_numbers<[1], [0], [0], [1], [0, 0, 1, 1], [], []>} : vector<64x32xbf16>, vector<32x1280xbf16>, vector<64x1280xf32> -> vector<64x1280xf32>
    %c0_11 = arith.constant 0 : index
    %c0_12 = arith.constant 0 : index
    %19 = vector.load %arg6[%c0_11, %c0_12] : memref<1x1280xf32, #tpu.memory_space<vmem>>, vector<1x1280xf32>
    %20 = vector.broadcast %19 : vector<1x1280xf32> to vector<64x1280xf32>
    %21 = arith.addf %18, %20 : vector<64x1280xf32>
    %22 = arith.truncf %21 : vector<64x1280xf32> to vector<64x1280xbf16>
    %23 = arith.negf %22 : vector<64x1280xbf16>
    %24 = math.exp %23 : vector<64x1280xbf16>
    %cst_13 = arith.constant 1.000000e+00 : bf16
    %25 = vector.broadcast %cst_13 : bf16 to vector<64x1280xbf16>
    %26 = arith.addf %25, %24 : vector<64x1280xbf16>
    %27 = arith.divf %25, %26 : vector<64x1280xbf16>
    %28 = arith.extf %27 : vector<64x1280xbf16> to vector<64x1280xf32>
    %29 = arith.mulf %21, %28 : vector<64x1280xf32>
    %c0_14 = arith.constant 0 : index
    %c0_15 = arith.constant 0 : index
    %30 = vector.load %arg10[%c0_14, %c0_15] : memref<8x1280xf32, #tpu.memory_space<vmem>>, vector<8x1280xf32>
    %31 = vector.shape_cast %29 : vector<64x1280xf32> to vector<8x8x1280xf32>
    %cst_16 = arith.constant dense<0.000000e+00> : vector<8x1280xf32>
    %32 = vector.multi_reduction <add>, %31, %cst_16 [0] : vector<8x8x1280xf32> to vector<8x1280xf32>
    %33 = arith.addf %30, %32 : vector<8x1280xf32>
    %c0_17 = arith.constant 0 : index
    %c0_18 = arith.constant 0 : index
    %34 = vector.load %arg10[%c0_17, %c0_18] : memref<8x1280xf32, #tpu.memory_space<vmem>>, vector<8x1280xf32>
    tpu.vector_store %arg10[%c0_17, %c0_18], %33 {strides = array<i32>} : memref<8x1280xf32, #tpu.memory_space<vmem>>, vector<8x1280xf32>,
    %c0_i32_19 = arith.constant 0 : i32
    %35 = arith.cmpi eq, %arg1, %c0_i32_19 : i32
    %36 = arith.extui %35 : i1 to i32
    %c0_i32_20 = arith.constant 0 : i32
    %37 = arith.cmpi ne, %36, %c0_i32_20 : i32
    scf.if %37 {
      %c0_21 = arith.constant 0 : index
      %c0_22 = arith.constant 0 : index
      %38 = vector.load %arg10[%c0_21, %c0_22] : memref<8x1280xf32, #tpu.memory_space<vmem>>, vector<8x1280xf32>
      %cst_23 = arith.constant dense<0.000000e+00> : vector<1280xf32>
      %39 = vector.multi_reduction <add>, %38, %cst_23 [0] : vector<8x1280xf32> to vector<1280xf32>
      %40 = vector.shape_cast %39 : vector<1280xf32> to vector<1x1280xf32>
      %cst_24 = arith.constant 1.562500e-02 : f32
      %41 = vector.broadcast %cst_24 : f32 to vector<1x1280xf32>
      %42 = arith.mulf %40, %41 : vector<1x1280xf32>
      %43 = arith.truncf %42 : vector<1x1280xf32> to vector<1x1280xbf16>
      %c0_25 = arith.constant 0 : index
      %c0_26 = arith.constant 0 : index
      %44 = vector.load %arg7[%c0_25, %c0_26] : memref<1280x128xbf16, #tpu.memory_space<vmem>>, vector<1280x128xbf16>
      %cst_27 = arith.constant dense<0.000000e+00> : vector<1x128xf32>
      %45 = tpu.matmul %43, %44, %cst_27 {dimension_numbers = #tpu.dot_dimension_numbers<[1], [0], [0], [1], [0, 0, 1, 1], [], []>} : vector<1x1280xbf16>, vector<1280x128xbf16>, vector<1x128xf32> -> vector<1x128xf32>
      %c0_28 = arith.constant 0 : index
      %c0_29 = arith.constant 0 : index
      %46 = vector.load %arg8[%c0_28, %c0_29] : memref<1x128xf32, #tpu.memory_space<vmem>>, vector<1x128xf32>
      %47 = arith.addf %45, %46 : vector<1x128xf32>
      %48 = vector.shape_cast %47 : vector<1x128xf32> to vector<1x1x128xf32>
      %c0_30 = arith.constant 0 : index
      %c0_31 = arith.constant 0 : index
      %c0_32 = arith.constant 0 : index
      %49 = vector.load %arg9[%c0_30, %c0_31, %c0_32] : memref<1x1x128xf32, #tpu.memory_space<vmem>>, vector<1x1x128xf32>
      tpu.vector_store %arg9[%c0_30, %c0_31, %c0_32], %48 {strides = array<i32>} : memref<1x1x128xf32, #tpu.memory_space<vmem>>, vector<1x1x128xf32>,
    } else {
    }
    return
  }
  func.func @transform_0(%arg0: i32, %arg1: i32) -> (i32, i32, i32) {
    %c0_i32 = arith.constant 0 : i32
    %c0_i32_0 = arith.constant 0 : i32
    return %arg0, %arg1, %c0_i32 : i32, i32, i32
  }
  func.func @transform_1(%arg0: i32, %arg1: i32) -> (i32, i32) {
    %c0_i32 = arith.constant 0 : i32
    %c0_i32_0 = arith.constant 0 : i32
    %c0_i32_1 = arith.constant 0 : i32
    return %c0_i32, %c0_i32_0 : i32, i32
  }
  func.func @transform_2(%arg0: i32, %arg1: i32) -> (i32, i32) {
    %c0_i32 = arith.constant 0 : i32
    %c0_i32_0 = arith.constant 0 : i32
    %c0_i32_1 = arith.constant 0 : i32
    return %c0_i32, %c0_i32_0 : i32, i32
  }
  func.func @transform_3(%arg0: i32, %arg1: i32) -> (i32, i32) {
    %c0_i32 = arith.constant 0 : i32
    %c0_i32_0 = arith.constant 0 : i32
    %c0_i32_1 = arith.constant 0 : i32
    return %c0_i32, %c0_i32_0 : i32, i32
  }
  func.func @transform_4(%arg0: i32, %arg1: i32) -> (i32, i32) {
    %c0_i32 = arith.constant 0 : i32
    %c0_i32_0 = arith.constant 0 : i32
    %c0_i32_1 = arith.constant 0 : i32
    return %c0_i32, %c0_i32_0 : i32, i32
  }
  func.func @transform_5(%arg0: i32, %arg1: i32) -> (i32, i32) {
    %c0_i32 = arith.constant 0 : i32
    %c0_i32_0 = arith.constant 0 : i32
    %c0_i32_1 = arith.constant 0 : i32
    return %c0_i32, %c0_i32_0 : i32, i32
  }
  func.func @transform_6(%arg0: i32, %arg1: i32) -> (i32, i32) {
    %c0_i32 = arith.constant 0 : i32
    %c0_i32_0 = arith.constant 0 : i32
    %c0_i32_1 = arith.constant 0 : i32
    return %c0_i32, %c0_i32_0 : i32, i32
  }
  func.func @transform_7(%arg0: i32, %arg1: i32) -> (i32, i32, i32) {
    %c0_i32 = arith.constant 0 : i32
    %c0_i32_0 = arith.constant 0 : i32
    %c0_i32_1 = arith.constant 0 : i32
    return %arg0, %c0_i32, %c0_i32_0 : i32, i32, i32
  }
}

module attributes {stable_mosaic.version = 11 : i64} {
  func.func @_head_kernel(%arg0: memref<4x128xf32, #tpu.memory_space<vmem>>, %arg1: memref<128x32xbf16, #tpu.memory_space<vmem>>, %arg2: memref<128x32xbf16, #tpu.memory_space<vmem>>, %arg3: memref<1x32xf32, #tpu.memory_space<vmem>>, %arg4: memref<32x32xbf16, #tpu.memory_space<vmem>>, %arg5: memref<1x32xf32, #tpu.memory_space<vmem>>, %arg6: memref<32x128xbf16, #tpu.memory_space<vmem>>, %arg7: memref<1x128xf32, #tpu.memory_space<vmem>>, %arg8: memref<2x128xf32, #tpu.memory_space<vmem>>) attributes {dimension_semantics = [], scalar_prefetch = 0 : i64, scratch_operands = 0 : i64, tpu.core_type = #tpu.core_type<tc>} {
    %c0 = arith.constant 0 : index
    %c0_0 = arith.constant 0 : index
    %0 = vector.load %arg0[%c0, %c0_0] : memref<4x128xf32, #tpu.memory_space<vmem>>, vector<4x128xf32>
    %1 = arith.truncf %0 : vector<4x128xf32> to vector<4x128xbf16>
    %2 = vector.extract_strided_slice %1 {offsets = [0, 0], sizes = [2, 128], strides = [1, 1]} : vector<4x128xbf16> to vector<2x128xbf16>
    %3 = vector.extract_strided_slice %1 {offsets = [2, 0], sizes = [2, 128], strides = [1, 1]} : vector<4x128xbf16> to vector<2x128xbf16>
    %c0_1 = arith.constant 0 : index
    %c0_2 = arith.constant 0 : index
    %4 = vector.load %arg1[%c0_1, %c0_2] : memref<128x32xbf16, #tpu.memory_space<vmem>>, vector<128x32xbf16>
    %cst = arith.constant dense<0.000000e+00> : vector<2x32xf32>
    %5 = tpu.matmul %2, %4, %cst {dimension_numbers = #tpu.dot_dimension_numbers<[1], [0], [0], [1], [0, 0, 1, 1], [], []>} : vector<2x128xbf16>, vector<128x32xbf16>, vector<2x32xf32> -> vector<2x32xf32>
    %c0_3 = arith.constant 0 : index
    %c0_4 = arith.constant 0 : index
    %6 = vector.load %arg2[%c0_3, %c0_4] : memref<128x32xbf16, #tpu.memory_space<vmem>>, vector<128x32xbf16>
    %cst_5 = arith.constant dense<0.000000e+00> : vector<2x32xf32>
    %7 = tpu.matmul %3, %6, %cst_5 {dimension_numbers = #tpu.dot_dimension_numbers<[1], [0], [0], [1], [0, 0, 1, 1], [], []>} : vector<2x128xbf16>, vector<128x32xbf16>, vector<2x32xf32> -> vector<2x32xf32>
    %8 = arith.addf %5, %7 : vector<2x32xf32>
    %c0_6 = arith.constant 0 : index
    %c0_7 = arith.constant 0 : index
    %9 = vector.load %arg3[%c0_6, %c0_7] : memref<1x32xf32, #tpu.memory_space<vmem>>, vector<1x32xf32>
    %10 = vector.broadcast %9 : vector<1x32xf32> to vector<2x32xf32>
    %11 = arith.addf %8, %10 : vector<2x32xf32>
    %cst_8 = arith.constant 0.000000e+00 : f32
    %12 = vector.broadcast %cst_8 : f32 to vector<2x32xf32>
    %13 = arith.maximumf %11, %12 : vector<2x32xf32>
    %14 = arith.truncf %13 : vector<2x32xf32> to vector<2x32xbf16>
    %c0_9 = arith.constant 0 : index
    %c0_10 = arith.constant 0 : index
    %15 = vector.load %arg4[%c0_9, %c0_10] : memref<32x32xbf16, #tpu.memory_space<vmem>>, vector<32x32xbf16>
    %cst_11 = arith.constant dense<0.000000e+00> : vector<2x32xf32>
    %16 = tpu.matmul %14, %15, %cst_11 {dimension_numbers = #tpu.dot_dimension_numbers<[1], [0], [0], [1], [0, 0, 1, 1], [], []>} : vector<2x32xbf16>, vector<32x32xbf16>, vector<2x32xf32> -> vector<2x32xf32>
    %c0_12 = arith.constant 0 : index
    %c0_13 = arith.constant 0 : index
    %17 = vector.load %arg5[%c0_12, %c0_13] : memref<1x32xf32, #tpu.memory_space<vmem>>, vector<1x32xf32>
    %18 = vector.broadcast %17 : vector<1x32xf32> to vector<2x32xf32>
    %19 = arith.addf %16, %18 : vector<2x32xf32>
    %cst_14 = arith.constant 0.000000e+00 : f32
    %20 = vector.broadcast %cst_14 : f32 to vector<2x32xf32>
    %21 = arith.maximumf %19, %20 : vector<2x32xf32>
    %22 = arith.truncf %21 : vector<2x32xf32> to vector<2x32xbf16>
    %c0_15 = arith.constant 0 : index
    %c0_16 = arith.constant 0 : index
    %23 = vector.load %arg6[%c0_15, %c0_16] : memref<32x128xbf16, #tpu.memory_space<vmem>>, vector<32x128xbf16>
    %cst_17 = arith.constant dense<0.000000e+00> : vector<2x128xf32>
    %24 = tpu.matmul %22, %23, %cst_17 {dimension_numbers = #tpu.dot_dimension_numbers<[1], [0], [0], [1], [0, 0, 1, 1], [], []>} : vector<2x32xbf16>, vector<32x128xbf16>, vector<2x128xf32> -> vector<2x128xf32>
    %c0_18 = arith.constant 0 : index
    %c0_19 = arith.constant 0 : index
    %25 = vector.load %arg7[%c0_18, %c0_19] : memref<1x128xf32, #tpu.memory_space<vmem>>, vector<1x128xf32>
    %26 = vector.broadcast %25 : vector<1x128xf32> to vector<2x128xf32>
    %27 = arith.addf %24, %26 : vector<2x128xf32>
    %c0_20 = arith.constant 0 : index
    %c0_21 = arith.constant 0 : index
    %28 = vector.load %arg8[%c0_20, %c0_21] : memref<2x128xf32, #tpu.memory_space<vmem>>, vector<2x128xf32>
    tpu.vector_store %arg8[%c0_20, %c0_21], %27 {strides = array<i32>} : memref<2x128xf32, #tpu.memory_space<vmem>>, vector<2x128xf32>,
    return
  }
}

</mosaic_0001>

<llo_original>
// kernel: pretrain_model_forward.3
$region0: #{pretrain_model_forward.3}
  #allocation0 [shape = 'u32[]', space=smem, size = 0x4, offset = 0x4, fixed_abs, tag = 'smem constant byte address 0x4 - core index']
  #allocation1 [shape = 'u32[144,128]{1,0:T(1,128)}', space=vmem, size = 0x12000, scoped, tag = 'internal scratch']
  %s0 = inlined_call_operand.vmem [shape: f32[4,128], index: 0, kind: input, shape index: {}]
  %s1 = inlined_call_operand.vmem [shape: bf16[128,32], index: 1, kind: input, shape index: {}]
  %s2 = inlined_call_operand.vmem [shape: bf16[128,32], index: 2, kind: input, shape index: {}]
  %s3 = inlined_call_operand.vmem [shape: f32[1,32], index: 3, kind: input, shape index: {}]
  %s4 = inlined_call_operand.vmem [shape: bf16[32,32], index: 4, kind: input, shape index: {}]
  %s5 = inlined_call_operand.vmem [shape: f32[1,32], index: 5, kind: input, shape index: {}]
  %s6 = inlined_call_operand.vmem [shape: bf16[32,128], index: 6, kind: input, shape index: {}]
  %s7 = inlined_call_operand.vmem [shape: f32[1,128], index: 7, kind: input, shape index: {}]
  %s8 = inlined_call_operand.hbm [shape: f32[2,128], index: 8, kind: output, shape index: {}]
  %s9 = sld [smem:[#allocation0]]
  $region42: #{pretrain_model_forward.3} parent=0
    _
  %s11 = ssub.s32 1, %s9
  %s12 = scalar_select 0, %s11, %s9
  $region1: #{pretrain_model_forward.3} parent=0
    #allocation2 [shape = 'u8[1024]{0}', space=vmem, size = 0x400, scoped, tag = 'output window, operand 0, single buffered']
    #allocation3 [shape = 's32[1]{0}', space=sflag, size = 0x4, scoped, tag = 'scoped memory for pretrain_model_forward.3']
    %13 = vsyncpa [#allocation3], 0
    // Predicated region
    $region2: #{pretrain_model_forward.3} parent=1 // pred_check
      _
    $region3: #{pretrain_model_forward.3} parent=1 // pred_check_branch
      %15 = sbr.rel (0) target = $region5
    $region4: #{pretrain_model_forward.3} parent=1 // pred_region
      _
    $region5: #{pretrain_model_forward.3} parent=1 // pred_fallthru
      _
    // Predicated region
    $region6: #{pretrain_model_forward.3} parent=1 // pred_check
      _
    $region7: #{pretrain_model_forward.3} parent=1 // pred_check_branch
      %17 = sbr.rel (0) target = $region9
    $region8: #{pretrain_model_forward.3} parent=1 // pred_region
      _
    $region9: #{pretrain_model_forward.3} parent=1 // pred_fallthru
      _
    // Predicated region
    $region10: #{pretrain_model_forward.3} parent=1 // pred_check
      _
    $region11: #{pretrain_model_forward.3} parent=1 // pred_check_branch
      %19 = sbr.rel (0) target = $region13
    $region12: #{pretrain_model_forward.3} parent=1 // pred_region
      _
    $region13: #{pretrain_model_forward.3} parent=1 // pred_fallthru
      _
    // Predicated region
    $region14: #{pretrain_model_forward.3} parent=1 // pred_check
      _
    $region15: #{pretrain_model_forward.3} parent=1 // pred_check_branch
      %21 = sbr.rel (0) target = $region17
    $region16: #{pretrain_model_forward.3} parent=1 // pred_region
      _
    $region17: #{pretrain_model_forward.3} parent=1 // pred_fallthru
      _
    // Predicated region
    $region18: #{pretrain_model_forward.3} parent=1 // pred_check
      _
    $region19: #{pretrain_model_forward.3} parent=1 // pred_check_branch
      %23 = sbr.rel (0) target = $region21
    $region20: #{pretrain_model_forward.3} parent=1 // pred_region
      _
    $region21: #{pretrain_model_forward.3} parent=1 // pred_fallthru
      _
    // Predicated region
    $region22: #{pretrain_model_forward.3} parent=1 // pred_check
      _
    $region23: #{pretrain_model_forward.3} parent=1 // pred_check_branch
      %25 = sbr.rel (0) target = $region25
    $region24: #{pretrain_model_forward.3} parent=1 // pred_region
      _
    $region25: #{pretrain_model_forward.3} parent=1 // pred_fallthru
      _
    // Predicated region
    $region26: #{pretrain_model_forward.3} parent=1 // pred_check
      _
    $region27: #{pretrain_model_forward.3} parent=1 // pred_check_branch
      %27 = sbr.rel (0) target = $region29
    $region28: #{pretrain_model_forward.3} parent=1 // pred_region
      _
    $region29: #{pretrain_model_forward.3} parent=1 // pred_fallthru
      _
    // Predicated region
    $region30: #{pretrain_model_forward.3} parent=1 // pred_check
      _
    $region31: #{pretrain_model_forward.3} parent=1 // pred_check_branch
      %29 = sbr.rel (0) target = $region33
    $region32: #{pretrain_model_forward.3} parent=1 // pred_region
      _
    $region33: #{pretrain_model_forward.3} parent=1 // pred_fallthru
      _
    %v31 = vld [vmem:[%s0] sm:$0xf]
    %v32 = vpack.c.bf16 %v31, %v31
    %v33 = vld [vmem:[%s1] sm:$0xf]
    %v34 = vld [vmem:[%s1 + $0x4] sm:$0xf]
    %v35 = vld [vmem:[%s1 + $0x8] sm:$0xf]
    %v36 = vld [vmem:[%s1 + $0xc] sm:$0xf]
    %v37 = vld [vmem:[%s1 + $0x10] sm:$0xf]
    %v38 = vld [vmem:[%s1 + $0x14] sm:$0xf]
    %v39 = vld [vmem:[%s1 + $0x18] sm:$0xf]
    %v40 = vld [vmem:[%s1 + $0x1c] sm:$0xf]
    %v41 = vld [vmem:[%s1 + $0x20] sm:$0xf]
    %v42 = vld [vmem:[%s1 + $0x24] sm:$0xf]
    %v43 = vld [vmem:[%s1 + $0x28] sm:$0xf]
    %v44 = vld [vmem:[%s1 + $0x2c] sm:$0xf]
    %v45 = vld [vmem:[%s1 + $0x30] sm:$0xf]
    %v46 = vld [vmem:[%s1 + $0x34] sm:$0xf]
    %v47 = vld [vmem:[%s1 + $0x38] sm:$0xf]
    %v48 = vld [vmem:[%s1 + $0x3c] sm:$0xf]
    %v49 = vld [vmem:[%s2] sm:$0xf]
    %v50 = vld [vmem:[%s2 + $0x4] sm:$0xf]
    %v51 = vld [vmem:[%s2 + $0x8] sm:$0xf]
    %v52 = vld [vmem:[%s2 + $0xc] sm:$0xf]
    %v53 = vld [vmem:[%s2 + $0x10] sm:$0xf]
    %v54 = vld [vmem:[%s2 + $0x14] sm:$0xf]
    %v55 = vld [vmem:[%s2 + $0x18] sm:$0xf]
    %v56 = vld [vmem:[%s2 + $0x1c] sm:$0xf]
    %v57 = vld [vmem:[%s2 + $0x20] sm:$0xf]
    %v58 = vld [vmem:[%s2 + $0x24] sm:$0xf]
    %v59 = vld [vmem:[%s2 + $0x28] sm:$0xf]
    %v60 = vld [vmem:[%s2 + $0x2c] sm:$0xf]
    %v61 = vld [vmem:[%s2 + $0x30] sm:$0xf]
    %v62 = vld [vmem:[%s2 + $0x34] sm:$0xf]
    %v63 = vld [vmem:[%s2 + $0x38] sm:$0xf]
    %v64 = vld [vmem:[%s2 + $0x3c] sm:$0xf]
    %v66 = vrot.slane %v32, 1
    %v84 = vunpack.c.l.b16 %v49
    %v85 = vunpack.c.l.b16 %v50
    %v86 = vunpack.c.l.b16 %v51
    %v87 = vunpack.c.l.b16 %v52
    %v88 = vunpack.c.l.b16 %v53
    %v89 = vunpack.c.l.b16 %v54
    %v90 = vunpack.c.l.b16 %v55
    %v91 = vunpack.c.l.b16 %v56
    %v92 = vunpack.c.l.b16 %v57
    %v93 = vunpack.c.l.b16 %v58
    %v94 = vunpack.c.l.b16 %v59
    %v95 = vunpack.c.l.b16 %v60
    %v96 = vunpack.c.l.b16 %v61
    %v97 = vunpack.c.l.b16 %v62
    %v98 = vunpack.c.l.b16 %v63
    %v99 = vunpack.c.l.b16 %v64
    %v100 = vpack.c.b16 %v85, %v84
    %v101 = vpack.c.b16 %v87, %v86
    %v102 = vpack.c.b16 %v89, %v88
    %v103 = vpack.c.b16 %v91, %v90
    %v104 = vpack.c.b16 %v93, %v92
    %v105 = vpack.c.b16 %v95, %v94
    %v106 = vpack.c.b16 %v97, %v96
    %v107 = vpack.c.b16 %v99, %v98
    %116 = vmatprep.subr.bf16.mxu0 0
    %117 = vmatpush1.bf16.msra.mxu0 %v100
    %118 = vmatprep.subr.bf16.mxu0 0
    %119 = vmatpush1.bf16.msra.mxu0 %v101
    %120 = vmatprep.subr.bf16.mxu0 0
    %121 = vmatpush1.bf16.msra.mxu0 %v102
    %122 = vmatprep.subr.bf16.mxu0 0
    %123 = vmatpush1.bf16.msra.mxu0 %v103
    %124 = vmatprep.subr.bf16.mxu0 0
    %125 = vmatpush1.bf16.msra.mxu0 %v104
    %126 = vmatprep.subr.bf16.mxu0 0
    %127 = vmatpush1.bf16.msra.mxu0 %v105
    %128 = vmatprep.subr.bf16.mxu0 0
    %129 = vmatpush1.bf16.msra.mxu0 %v106
    %130 = vmatprep.subr.bf16.mxu0 0
    %131 = vmatpush1.bf16.msra.mxu0 %v107
    %132 = vmatprep.subr.bf16.mxu0 0
    %133 = vmatpush1.bf16.msra.mxu0 0
    %134 = vmatprep.subr.bf16.mxu0 0
    %135 = vmatpush1.bf16.msra.mxu0 0
    %136 = vmatprep.subr.bf16.mxu0 0
    %137 = vmatpush1.bf16.msra.mxu0 0
    %138 = vmatprep.subr.bf16.mxu0 0
    %139 = vmatpush1.bf16.msra.mxu0 0
    %140 = vmatprep.subr.bf16.mxu0 0
    %141 = vmatpush1.bf16.msra.mxu0 0
    %142 = vmatprep.subr.bf16.mxu0 0
    %143 = vmatpush1.bf16.msra.mxu0 0
    %144 = vmatprep.subr.bf16.mxu0 0
    %145 = vmatpush1.bf16.msra.mxu0 0
    %146 = vmatprep.subr.bf16.mxu0 0
    %147 = vmatpush1.bf16.msra.mxu0 0
    %148 = vmatprep.mubr.bf16.mxu0 0
    %149 = vmatmul.mubr.bf16.gmra.mrb[0].mxu0 %v66
    %v150 = vpop.f32.mrb[0].mxu0
    %v151 = vadd.f32 0.0, %v150
    %v152 = vpop.f32.mrb[0].mxu0
    %v153 = vpop.f32.mrb[0].mxu0
    %v154 = vpop.f32.mrb[0].mxu0
    %155 = vdwg.mxu0
    %v172 = vunpack.c.l.b16 %v33
    %v173 = vunpack.c.l.b16 %v34
    %v174 = vunpack.c.l.b16 %v35
    %v175 = vunpack.c.l.b16 %v36
    %v176 = vunpack.c.l.b16 %v37
    %v177 = vunpack.c.l.b16 %v38
    %v178 = vunpack.c.l.b16 %v39
    %v179 = vunpack.c.l.b16 %v40
    %v180 = vunpack.c.l.b16 %v41
    %v181 = vunpack.c.l.b16 %v42
    %v182 = vunpack.c.l.b16 %v43
    %v183 = vunpack.c.l.b16 %v44
    %v184 = vunpack.c.l.b16 %v45
    %v185 = vunpack.c.l.b16 %v46
    %v186 = vunpack.c.l.b16 %v47
    %v187 = vunpack.c.l.b16 %v48
    %v188 = vpack.c.b16 %v173, %v172
    %v189 = vpack.c.b16 %v175, %v174
    %v190 = vpack.c.b16 %v177, %v176
    %v191 = vpack.c.b16 %v179, %v178
    %v192 = vpack.c.b16 %v181, %v180
    %v193 = vpack.c.b16 %v183, %v182
    %v194 = vpack.c.b16 %v185, %v184
    %v195 = vpack.c.b16 %v187, %v186
    %204 = vmatprep.subr.bf16.mxu0 0
    %205 = vmatpush1.bf16.msra.mxu0 %v188
    %206 = vmatprep.subr.bf16.mxu0 0
    %207 = vmatpush1.bf16.msra.mxu0 %v189
    %208 = vmatprep.subr.bf16.mxu0 0
    %209 = vmatpush1.bf16.msra.mxu0 %v190
    %210 = vmatprep.subr.bf16.mxu0 0
    %211 = vmatpush1.bf16.msra.mxu0 %v191
    %212 = vmatprep.subr.bf16.mxu0 0
    %213 = vmatpush1.bf16.msra.mxu0 %v192
    %214 = vmatprep.subr.bf16.mxu0 0
    %215 = vmatpush1.bf16.msra.mxu0 %v193
    %216 = vmatprep.subr.bf16.mxu0 0
    %217 = vmatpush1.bf16.msra.mxu0 %v194
    %218 = vmatprep.subr.bf16.mxu0 0
    %219 = vmatpush1.bf16.msra.mxu0 %v195
    %220 = vmatprep.subr.bf16.mxu0 0
    %221 = vmatpush1.bf16.msra.mxu0 0
    %222 = vmatprep.subr.bf16.mxu0 0
    %223 = vmatpush1.bf16.msra.mxu0 0
    %224 = vmatprep.subr.bf16.mxu0 0
    %225 = vmatpush1.bf16.msra.mxu0 0
    %226 = vmatprep.subr.bf16.mxu0 0
    %227 = vmatpush1.bf16.msra.mxu0 0
    %228 = vmatprep.subr.bf16.mxu0 0
    %229 = vmatpush1.bf16.msra.mxu0 0
    %230 = vmatprep.subr.bf16.mxu0 0
    %231 = vmatpush1.bf16.msra.mxu0 0
    %232 = vmatprep.subr.bf16.mxu0 0
    %233 = vmatpush1.bf16.msra.mxu0 0
    %234 = vmatprep.subr.bf16.mxu0 0
    %235 = vmatpush1.bf16.msra.mxu0 0
    %236 = vmatprep.mubr.bf16.mxu0 0
    %237 = vmatmul.mubr.bf16.gmra.mrb[0].mxu0 %v32
    %v238 = vpop.f32.mrb[0].mxu0
    %v239 = vadd.f32 %v151, %v238
    %v240 = vpop.f32.mrb[0].mxu0
    %v241 = vpop.f32.mrb[0].mxu0
    %v242 = vpop.f32.mrb[0].mxu0
    %243 = vdwg.mxu0
    %v244 = vld [vmem:[%s3] sm:$0x1]
    %v246 = vlaneseq
    %v247 = vshrl.u32 %v246, 7
    %v248 = vsub.s32 0, %v247
    %v249 = vrot.slane %v244, %v248
    %v251 = vadd.f32 %v239, %v249
    %v252 = vmax.f32 %v251, 0.0
    %v253 = vpack.c.bf16 %v252, %v252
    %v254 = vld [vmem:[%s4] sm:$0xf]
    %v255 = vld [vmem:[%s4 + $0x4] sm:$0xf]
    %v256 = vld [vmem:[%s4 + $0x8] sm:$0xf]
    %v257 = vld [vmem:[%s4 + $0xc] sm:$0xf]
    %v258 = vld [vmem:[%s5] sm:$0x1]
    %v260 = vlaneseq
    %v261 = vshrl.u32 %v260, 7
    %v262 = vsub.s32 0, %v261
    %v263 = vrot.slane %v258, %v262
    %v269 = vunpack.c.l.b16 %v254
    %v270 = vunpack.c.l.b16 %v255
    %v271 = vunpack.c.l.b16 %v256
    %v272 = vunpack.c.l.b16 %v257
    %v273 = vpack.c.b16 %v270, %v269
    %v274 = vpack.c.b16 %v272, %v271
    %vm277 = vcmask 261120
    %v279 = vsel %vm277, %v253, 0
    %281 = vmatprep.subr.bf16.mxu0 0
    %282 = vmatpush1.bf16.msra.mxu0 %v273
    %283 = vmatprep.subr.bf16.mxu0 0
    %284 = vmatpush1.bf16.msra.mxu0 %v274
    %285 = vmatprep.subr.bf16.mxu0 0
    %286 = vmatpush1.bf16.msra.mxu0 0
    %287 = vmatprep.subr.bf16.mxu0 0
    %288 = vmatpush1.bf16.msra.mxu0 0
    %289 = vmatprep.subr.bf16.mxu0 0
    %290 = vmatpush1.bf16.msra.mxu0 0
    %291 = vmatprep.subr.bf16.mxu0 0
    %292 = vmatpush1.bf16.msra.mxu0 0
    %293 = vmatprep.subr.bf16.mxu0 0
    %294 = vmatpush1.bf16.msra.mxu0 0
    %295 = vmatprep.subr.bf16.mxu0 0
    %296 = vmatpush1.bf16.msra.mxu0 0
    %297 = vmatprep.subr.bf16.mxu0 0
    %298 = vmatpush1.bf16.msra.mxu0 0
    %299 = vmatprep.subr.bf16.mxu0 0
    %300 = vmatpush1.bf16.msra.mxu0 0
    %301 = vmatprep.subr.bf16.mxu0 0
    %302 = vmatpush1.bf16.msra.mxu0 0
    %303 = vmatprep.subr.bf16.mxu0 0
    %304 = vmatpush1.bf16.msra.mxu0 0
    %305 = vmatprep.subr.bf16.mxu0 0
    %306 = vmatpush1.bf16.msra.mxu0 0
    %307 = vmatprep.subr.bf16.mxu0 0
    %308 = vmatpush1.bf16.msra.mxu0 0
    %309 = vmatprep.subr.bf16.mxu0 0
    %310 = vmatpush1.bf16.msra.mxu0 0
    %311 = vmatprep.subr.bf16.mxu0 0
    %312 = vmatpush1.bf16.msra.mxu0 0
    %313 = vmatprep.mubr.bf16.mxu0 0
    %314 = vmatmul.mubr.bf16.gmra.mrb[0].mxu0 %v279
    %v315 = vpop.f32.mrb[0].mxu0
    %v316 = vadd.f32 %v263, %v315
    %v317 = vpop.f32.mrb[0].mxu0
    %v318 = vpop.f32.mrb[0].mxu0
    %v319 = vpop.f32.mrb[0].mxu0
    %320 = vdwg.mxu0
    %v321 = vmax.f32 %v316, 0.0
    %v322 = vpack.c.bf16 %v321, %v321
    %v323 = vld [vmem:[%s6] sm:$0xf]
    %v324 = vld [vmem:[%s6 + $0x4] sm:$0xf]
    %v325 = vld [vmem:[%s6 + $0x8] sm:$0xf]
    %v326 = vld [vmem:[%s6 + $0xc] sm:$0xf]
    %v327 = vld [vmem:[%s7] sm:$0x1]
    %v329 = vlaneseq
    %v330 = vshrl.u32 %v329, 7
    %v331 = vsub.s32 0, %v330
    %v332 = vrot.slane %v327, %v331
    %v338 = vunpack.c.l.b16 %v323
    %v339 = vunpack.c.l.b16 %v324
    %v340 = vunpack.c.l.b16 %v325
    %v341 = vunpack.c.l.b16 %v326
    %v342 = vpack.c.b16 %v339, %v338
    %v343 = vpack.c.b16 %v341, %v340
    %v347 = vsel %vm277, %v322, 0
    %349 = vmatprep.subr.bf16.mxu0 0
    %350 = vmatpush1.bf16.msra.mxu0 %v342
    %351 = vmatprep.subr.bf16.mxu0 0
    %352 = vmatpush1.bf16.msra.mxu0 %v343
    %353 = vmatprep.subr.bf16.mxu0 0
    %354 = vmatpush1.bf16.msra.mxu0 0
    %355 = vmatprep.subr.bf16.mxu0 0
    %356 = vmatpush1.bf16.msra.mxu0 0
    %357 = vmatprep.subr.bf16.mxu0 0
    %358 = vmatpush1.bf16.msra.mxu0 0
    %359 = vmatprep.subr.bf16.mxu0 0
    %360 = vmatpush1.bf16.msra.mxu0 0
    %361 = vmatprep.subr.bf16.mxu0 0
    %362 = vmatpush1.bf16.msra.mxu0 0
    %363 = vmatprep.subr.bf16.mxu0 0
    %364 = vmatpush1.bf16.msra.mxu0 0
    %365 = vmatprep.subr.bf16.mxu0 0
    %366 = vmatpush1.bf16.msra.mxu0 0
    %367 = vmatprep.subr.bf16.mxu0 0
    %368 = vmatpush1.bf16.msra.mxu0 0
    %369 = vmatprep.subr.bf16.mxu0 0
    %370 = vmatpush1.bf16.msra.mxu0 0
    %371 = vmatprep.subr.bf16.mxu0 0
    %372 = vmatpush1.bf16.msra.mxu0 0
    %373 = vmatprep.subr.bf16.mxu0 0
    %374 = vmatpush1.bf16.msra.mxu0 0
    %375 = vmatprep.subr.bf16.mxu0 0
    %376 = vmatpush1.bf16.msra.mxu0 0
    %377 = vmatprep.subr.bf16.mxu0 0
    %378 = vmatpush1.bf16.msra.mxu0 0
    %379 = vmatprep.subr.bf16.mxu0 0
    %380 = vmatpush1.bf16.msra.mxu0 0
    %381 = vmatprep.mubr.bf16.mxu0 0
    %382 = vmatmul.mubr.bf16.gmra.mrb[0].mxu0 %v347
    %v383 = vpop.f32.mrb[0].mxu0
    %v384 = vadd.f32 %v332, %v383
    %v385 = vpop.f32.mrb[0].mxu0
    %v386 = vpop.f32.mrb[0].mxu0
    %v387 = vpop.f32.mrb[0].mxu0
    %388 = vdwg.mxu0
    %389 = vst [vmem:[#allocation2] sm:$0x3] %v384
    // Predicated region
    $region34: #{pretrain_model_forward.3} parent=1 // pred_check
      _
    $region35: #{pretrain_model_forward.3} parent=1 // pred_check_branch
      %391 = sbr.rel (0) target = $region37
    $region36: #{pretrain_model_forward.3} parent=1 // pred_region
      %s393 = ssub.s32 32, 32
      %394 = vsyncadd [#allocation3], %s393
      %s396 = sshll.u32 [#allocation2], 4
      %s397 = int_to_ptr.vmem [resolvable:$true] %s396
      %399 = dma.vmem_to_hbm [thread:$0]  %s397, 32, %s8, [#allocation3]
    $region37: #{pretrain_model_forward.3} parent=1 // pred_fallthru
      _
    // Predicated region
    $region38: #{pretrain_model_forward.3} parent=1 // pred_check
      _
    $region39: #{pretrain_model_forward.3} parent=1 // pred_check_branch
      %401 = sbr.rel (0) target = $region41
    $region40: #{pretrain_model_forward.3} parent=1 // pred_region
      %402 = dma.done [#allocation3], 32
    $region41: #{pretrain_model_forward.3} parent=1 // pred_fallthru
      _
    %403 = vsyncpa [#allocation3], 1

// kernel: pretrain_model_forward.2
$region0: #{pretrain_model_forward.2}
  #allocation0 [shape = 'u32[]', space=smem, size = 0x4, offset = 0x4, fixed_abs, tag = 'smem constant byte address 0x4 - core index']
  #allocation1 [shape = 'u32[144,128]{1,0:T(1,128)}', space=vmem, size = 0x12000, scoped, tag = 'internal scratch']
  #allocation2 [shape = 'f32[8,1280]{1,0:T(8,128)}', space=vmem, size = 0xa000, scoped, tag = 'scratch operand']
  %s0 = inlined_call_operand.vmem [shape: bf16[4,64,32], index: 0, kind: input, shape index: {}]
  %s1 = inlined_call_operand.vmem [shape: bf16[32,32], index: 1, kind: input, shape index: {}]
  %s2 = inlined_call_operand.vmem [shape: f32[1,32], index: 2, kind: input, shape index: {}]
  %s3 = inlined_call_operand.vmem [shape: bf16[32,1280], index: 3, kind: input, shape index: {}]
  %s4 = inlined_call_operand.vmem [shape: f32[1,1280], index: 4, kind: input, shape index: {}]
  %s5 = inlined_call_operand.vmem [shape: bf16[1280,128], index: 5, kind: input, shape index: {}]
  %s6 = inlined_call_operand.vmem [shape: f32[1,128], index: 6, kind: input, shape index: {}]
  %s7 = inlined_call_operand.vmem [shape: f32[4,1,128], index: 7, kind: output, shape index: {}]
  %s8 = sld [smem:[#allocation0]]
  $region69: #{pretrain_model_forward.2} parent=0
    _
  %s10 = ssub.s32 1, %s8
  %s11 = scalar_select 0, %s10, %s8
  loop: start=0, step=1, limit=6
  $region2: #{pretrain_model_forward.2} parent=0 // loop_pre_header
    _
  $region3: #{pretrain_model_forward.2} parent=0 // loop_header
    %s13 = sphi 0, %s17
    %p14 = scmp.ge.s32.totalorder %s13, 6
    %s20 = sphi 0, %s32
    %s21 = sphi 0, %s28
    %s22 = sphi 0, %s20
    %s23 = sphi 0, %s21
    %s24 = sphi 0, %s22
    %s25 = sphi 0, %s23
    %s37 = sphi 0, %s39
    %s40 = sphi 0, %s37
    %s41 = sphi 0, %s40
    %s57 = sphi 0, %s41
    %s61 = sphi 0, %s61
    %s63 = sphi 0, %s61
    %s64 = sphi 0, %s63
    %s78 = sphi 0, %s64
    %s82 = sphi 0, %s82
    %s84 = sphi 0, %s82
    %s85 = sphi 0, %s84
    %s99 = sphi 0, %s85
    %s103 = sphi 0, %s103
    %s105 = sphi 0, %s103
    %s106 = sphi 0, %s105
    %s120 = sphi 0, %s106
    %s124 = sphi 0, %s124
    %s126 = sphi 0, %s124
    %s127 = sphi 0, %s126
    %s141 = sphi 0, %s127
    %s145 = sphi 0, %s145
    %s147 = sphi 0, %s145
    %s148 = sphi 0, %s147
    %s162 = sphi 0, %s148
    %s166 = sphi 0, %s166
    %s168 = sphi 0, %s166
    %s169 = sphi 0, %s168
    %s183 = sphi 0, %s169
    %s189 = sphi 0, %s191
    %s192 = sphi 0, %s189
    %s193 = sphi 0, %s192
    %s209 = sphi 0, %s193
  $region4: #{pretrain_model_forward.2} parent=0 // loop_header_branch
    %16 = sbr.rel (%p14) target = $region8
  $region5: #{pretrain_model_forward.2} parent=0 // loop_body
    %s18 = ssub.s32 %s13, 1
    %s19 = ssub.s32 %s13, 2
    %s26 = sadd.s32 1, %s21
    %p27 = scmp.ge.s32.totalorder %s26, 1
    %s28 = scalar_select %p27, 0, %s26
    %s29 = sadd.s32 1, %s20
    %s30 = scalar_select %p27, %s29, %s20
    %p31 = scmp.ge.s32.totalorder %s30, 4
    %s32 = scalar_select %p31, 0, %s30
    %s33 = ssub.s32 %s20, %s32
    %s34 = ssub.s32 %s21, %s28
    %s35 = sor.u32 %s33, %s34
    %p36 = scmp.eq.s32.totalorder %s35, 0
    %s38 = sadd.s32 %s37, 1
    %s39 = scalar_select %p36, %s37, %s38
    %p42 = pneg %p36
    %p43 = scmp.eq.s32.totalorder %s13, 3
    %p44 = por %p42, %p43
    %p45 = scmp.ne.s32.totalorder %s37, %s40
    %p46 = scmp.eq.s32.totalorder %s13, 0
    %p47 = por %p45, %p46
    %p48 = scmp.ne.s32.totalorder %s37, %s40
    %p49 = scmp.eq.s32.totalorder %s18, 3
    %p50 = por %p48, %p49
    %p51 = scmp.ne.s32.totalorder %s40, %s41
    %p52 = scmp.eq.s32.totalorder %s18, 0
    %p53 = por %p51, %p52
    %p54 = scmp.ne.s32.totalorder %s40, %s41
    %p55 = scmp.eq.s32.totalorder %s19, 3
    %p56 = por %p54, %p55
    %p58 = scmp.ne.s32.totalorder %s41, %s57
    %p59 = scmp.eq.s32.totalorder %s19, 0
    %p60 = por %p58, %p59
    %s62 = sadd.s32 %s61, 1
    %p65 = scmp.eq.s32.totalorder %s13, 3
    %p66 = scmp.ne.s32.totalorder %s61, %s63
    %p67 = scmp.eq.s32.totalorder %s13, 0
    %p68 = por %p66, %p67
    %p69 = scmp.ne.s32.totalorder %s61, %s63
    %p70 = scmp.eq.s32.totalorder %s18, 3
    %p71 = por %p69, %p70
    %p72 = scmp.ne.s32.totalorder %s63, %s64
    %p73 = scmp.eq.s32.totalorder %s18, 0
    %p74 = por %p72, %p73
    %p75 = scmp.ne.s32.totalorder %s63, %s64
    %p76 = scmp.eq.s32.totalorder %s19, 3
    %p77 = por %p75, %p76
    %p79 = scmp.ne.s32.totalorder %s64, %s78
    %p80 = scmp.eq.s32.totalorder %s19, 0
    %p81 = por %p79, %p80
    %s83 = sadd.s32 %s82, 1
    %p86 = scmp.eq.s32.totalorder %s13, 3
    %p87 = scmp.ne.s32.totalorder %s82, %s84
    %p88 = scmp.eq.s32.totalorder %s13, 0
    %p89 = por %p87, %p88
    %p90 = scmp.ne.s32.totalorder %s82, %s84
    %p91 = scmp.eq.s32.totalorder %s18, 3
    %p92 = por %p90, %p91
    %p93 = scmp.ne.s32.totalorder %s84, %s85
    %p94 = scmp.eq.s32.totalorder %s18, 0
    %p95 = por %p93, %p94
    %p96 = scmp.ne.s32.totalorder %s84, %s85
    %p97 = scmp.eq.s32.totalorder %s19, 3
    %p98 = por %p96, %p97
    %p100 = scmp.ne.s32.totalorder %s85, %s99
    %p101 = scmp.eq.s32.totalorder %s19, 0
    %p102 = por %p100, %p101
    %s104 = sadd.s32 %s103, 1
    %p107 = scmp.eq.s32.totalorder %s13, 3
    %p108 = scmp.ne.s32.totalorder %s103, %s105
    %p109 = scmp.eq.s32.totalorder %s13, 0
    %p110 = por %p108, %p109
    %p111 = scmp.ne.s32.totalorder %s103, %s105
    %p112 = scmp.eq.s32.totalorder %s18, 3
    %p113 = por %p111, %p112
    %p114 = scmp.ne.s32.totalorder %s105, %s106
    %p115 = scmp.eq.s32.totalorder %s18, 0
    %p116 = por %p114, %p115
    %p117 = scmp.ne.s32.totalorder %s105, %s106
    %p118 = scmp.eq.s32.totalorder %s19, 3
    %p119 = por %p117, %p118
    %p121 = scmp.ne.s32.totalorder %s106, %s120
    %p122 = scmp.eq.s32.totalorder %s19, 0
    %p123 = por %p121, %p122
    %s125 = sadd.s32 %s124, 1
    %p128 = scmp.eq.s32.totalorder %s13, 3
    %p129 = scmp.ne.s32.totalorder %s124, %s126
    %p130 = scmp.eq.s32.totalorder %s13, 0
    %p131 = por %p129, %p130
    %p132 = scmp.ne.s32.totalorder %s124, %s126
    %p133 = scmp.eq.s32.totalorder %s18, 3
    %p134 = por %p132, %p133
    %p135 = scmp.ne.s32.totalorder %s126, %s127
    %p136 = scmp.eq.s32.totalorder %s18, 0
    %p137 = por %p135, %p136
    %p138 = scmp.ne.s32.totalorder %s126, %s127
    %p139 = scmp.eq.s32.totalorder %s19, 3
    %p140 = por %p138, %p139
    %p142 = scmp.ne.s32.totalorder %s127, %s141
    %p143 = scmp.eq.s32.totalorder %s19, 0
    %p144 = por %p142, %p143
    %s146 = sadd.s32 %s145, 1
    %p149 = scmp.eq.s32.totalorder %s13, 3
    %p150 = scmp.ne.s32.totalorder %s145, %s147
    %p151 = scmp.eq.s32.totalorder %s13, 0
    %p152 = por %p150, %p151
    %p153 = scmp.ne.s32.totalorder %s145, %s147
    %p154 = scmp.eq.s32.totalorder %s18, 3
    %p155 = por %p153, %p154
    %p156 = scmp.ne.s32.totalorder %s147, %s148
    %p157 = scmp.eq.s32.totalorder %s18, 0
    %p158 = por %p156, %p157
    %p159 = scmp.ne.s32.totalorder %s147, %s148
    %p160 = scmp.eq.s32.totalorder %s19, 3
    %p161 = por %p159, %p160
    %p163 = scmp.ne.s32.totalorder %s148, %s162
    %p164 = scmp.eq.s32.totalorder %s19, 0
    %p165 = por %p163, %p164
    %s167 = sadd.s32 %s166, 1
    %p170 = scmp.eq.s32.totalorder %s13, 3
    %p171 = scmp.ne.s32.totalorder %s166, %s168
    %p172 = scmp.eq.s32.totalorder %s13, 0
    %p173 = por %p171, %p172
    %p174 = scmp.ne.s32.totalorder %s166, %s168
    %p175 = scmp.eq.s32.totalorder %s18, 3
    %p176 = por %p174, %p175
    %p177 = scmp.ne.s32.totalorder %s168, %s169
    %p178 = scmp.eq.s32.totalorder %s18, 0
    %p179 = por %p177, %p178
    %p180 = scmp.ne.s32.totalorder %s168, %s169
    %p181 = scmp.eq.s32.totalorder %s19, 3
    %p182 = por %p180, %p181
    %p184 = scmp.ne.s32.totalorder %s169, %s183
    %p185 = scmp.eq.s32.totalorder %s19, 0
    %p186 = por %p184, %p185
    %s187 = ssub.s32 %s20, %s32
    %p188 = scmp.eq.s32.totalorder %s187, 0
    %s190 = sadd.s32 %s189, 1
    %s191 = scalar_select %p188, %s189, %s190
    %p194 = pneg %p188
    %p195 = scmp.eq.s32.totalorder %s13, 3
    %p196 = por %p194, %p195
    %p197 = scmp.ne.s32.totalorder %s189, %s192
    %p198 = scmp.eq.s32.totalorder %s13, 0
    %p199 = por %p197, %p198
    %p200 = scmp.ne.s32.totalorder %s189, %s192
    %p201 = scmp.eq.s32.totalorder %s18, 3
    %p202 = por %p200, %p201
    %p203 = scmp.ne.s32.totalorder %s192, %s193
    %p204 = scmp.eq.s32.totalorder %s18, 0
    %p205 = por %p203, %p204
    %p206 = scmp.ne.s32.totalorder %s192, %s193
    %p207 = scmp.eq.s32.totalorder %s19, 3
    %p208 = por %p206, %p207
    %p210 = scmp.ne.s32.totalorder %s193, %s209
    %p211 = scmp.eq.s32.totalorder %s19, 0
    %p212 = por %p210, %p211
    %p213 = scmp.le.s32.totalorder 1, %s13
    %p214 = scmp.lt.s32.totalorder %s13, 5
    %p215 = pnand %p213, %p214
    %p216 = pneg %p215
    // Predicated region
    $region9: #{pretrain_model_forward.2} parent=5 // pred_check
      _
    $region10: #{pretrain_model_forward.2} parent=5 // pred_check_branch
      %218 = sbr.rel (%p215) target = $region12
    $region11: #{pretrain_model_forward.2} parent=5 // pred_region
      %s219 = ssub.s32 %s13, 1
      // Predicated region
      $region13: #{pretrain_model_forward.2} parent=11 // pred_check
        %p220 = pneg %p74
      $region14: #{pretrain_model_forward.2} parent=11 // pred_check_branch
        %222 = sbr.rel (%p220) target = $region16
      $region15: #{pretrain_model_forward.2} parent=11 // pred_region
        _
      $region16: #{pretrain_model_forward.2} parent=11 // pred_fallthru
        _
      // Predicated region
      $region17: #{pretrain_model_forward.2} parent=11 // pred_check
        %p223 = pneg %p95
      $region18: #{pretrain_model_forward.2} parent=11 // pred_check_branch
        %225 = sbr.rel (%p223) target = $region20
      $region19: #{pretrain_model_forward.2} parent=11 // pred_region
        _
      $region20: #{pretrain_model_forward.2} parent=11 // pred_fallthru
        _
      // Predicated region
      $region21: #{pretrain_model_forward.2} parent=11 // pred_check
        %p226 = pneg %p116
      $region22: #{pretrain_model_forward.2} parent=11 // pred_check_branch
        %228 = sbr.rel (%p226) target = $region24
      $region23: #{pretrain_model_forward.2} parent=11 // pred_region
        _
      $region24: #{pretrain_model_forward.2} parent=11 // pred_fallthru
        _
      // Predicated region
      $region25: #{pretrain_model_forward.2} parent=11 // pred_check
        %p229 = pneg %p137
      $region26: #{pretrain_model_forward.2} parent=11 // pred_check_branch
        %231 = sbr.rel (%p229) target = $region28
      $region27: #{pretrain_model_forward.2} parent=11 // pred_region
        _
      $region28: #{pretrain_model_forward.2} parent=11 // pred_fallthru
        _
      // Predicated region
      $region29: #{pretrain_model_forward.2} parent=11 // pred_check
        %p232 = pneg %p158
      $region30: #{pretrain_model_forward.2} parent=11 // pred_check_branch
        %234 = sbr.rel (%p232) target = $region32
      $region31: #{pretrain_model_forward.2} parent=11 // pred_region
        _
      $region32: #{pretrain_model_forward.2} parent=11 // pred_fallthru
        _
      // Predicated region
      $region33: #{pretrain_model_forward.2} parent=11 // pred_check
        %p235 = pneg %p179
      $region34: #{pretrain_model_forward.2} parent=11 // pred_check_branch
        %237 = sbr.rel (%p235) target = $region36
      $region35: #{pretrain_model_forward.2} parent=11 // pred_region
        _
      $region36: #{pretrain_model_forward.2} parent=11 // pred_fallthru
        _
    $region12: #{pretrain_model_forward.2} parent=5 // pred_fallthru
      _
    %p238 = scmp.lt.s32.totalorder %s13, 4
    // Predicated region
    $region37: #{pretrain_model_forward.2} parent=5 // pred_check
      %p239 = pneg %p238
    $region38: #{pretrain_model_forward.2} parent=5 // pred_check_branch
      %241 = sbr.rel (%p239) target = $region40
    $region39: #{pretrain_model_forward.2} parent=5 // pred_region
      // Predicated region
      $region41: #{pretrain_model_forward.2} parent=39 // pred_check
        %p242 = pneg %p47
      $region42: #{pretrain_model_forward.2} parent=39 // pred_check_branch
        %244 = sbr.rel (%p242) target = $region44
      $region43: #{pretrain_model_forward.2} parent=39 // pred_region
        %s245 = smul.u32 8, %s21
        %p246 = scmp.lt.s32.totalorder %s20, 3
        %s247 = scalar_select %p246, %s20, 3
        %p248 = scmp.lt.s32.totalorder %s245, 7
        %s249 = scalar_select %p248, %s245, 7
        %s250 = smul.addr %s247, 8
        %s251 = sadd.s32 %s249, %s250
        %s252 = smul.addr %s251, 4
        %s253 = scalar_lea.vmem %s0, %s252
        %s254 = smul.u32 8, %s21
      $region44: #{pretrain_model_forward.2} parent=39 // pred_fallthru
        _
    $region40: #{pretrain_model_forward.2} parent=5 // pred_fallthru
      _
    %p255 = scmp.le.s32.totalorder 1, %s13
    %p256 = scmp.lt.s32.totalorder %s13, 5
    %p257 = pnand %p255, %p256
    %p258 = pneg %p257
    // Predicated region
    $region45: #{pretrain_model_forward.2} parent=5 // pred_check
      _
    $region46: #{pretrain_model_forward.2} parent=5 // pred_check_branch
      %260 = sbr.rel (%p257) target = $region48
    $region47: #{pretrain_model_forward.2} parent=5 // pred_region
      %s261 = ssub.s32 %s13, 1
      %s262 = smul.u32 8, %s23
      %p263 = scmp.lt.s32.totalorder %s22, 3
      %s264 = scalar_select %p263, %s22, 3
      %p265 = scmp.lt.s32.totalorder %s262, 7
      %s266 = scalar_select %p265, %s262, 7
      %s267 = smul.addr %s264, 8
      %s268 = sadd.s32 %s266, %s267
      %s269 = smul.addr %s268, 4
      %s270 = scalar_lea.vmem %s0, %s269
      %p271 = pneg %p53
      %p272 = pneg %p50
      %p273 = pneg %p74
      %p274 = pneg %p71
      %p275 = pneg %p95
      %p276 = pneg %p92
      %p277 = pneg %p116
      %p278 = pneg %p113
      %p279 = pneg %p137
      %p280 = pneg %p134
      %p281 = pneg %p158
      %p282 = pneg %p155
      %p283 = pneg %p179
      %p284 = pneg %p176
      %p285 = pneg %p205
      %p286 = pneg %p202
      %p287 = scmp.lt.s32.totalorder %s22, 3
      %s288 = scalar_select %p287, %s22, 3
      %s289 = scalar_lea.vmem %s7, %s288
      %s290 = smul.u32 8, %s23
      %p291 = scmp.lt.s32.totalorder %s22, 3
      %s292 = scalar_select %p291, %s22, 3
      %p293 = scmp.lt.s32.totalorder %s290, 7
      %s294 = scalar_select %p293, %s290, 7
      %s295 = smul.addr %s292, 8
      %s296 = sadd.s32 %s294, %s295
      %s297 = smul.addr %s296, 4
      %s298 = scalar_lea.vmem %s0, %s297
      %s299 = smul.u32 8, %s23
      %p300 = scmp.lt.s32.totalorder %s22, 3
      %s301 = scalar_select %p300, %s22, 3
      %s302 = scalar_lea.vmem %s7, %s301
      %p305 = scmp.eq.s32.totalorder %s23, 0
      // Predicated region
      $region49: #{pretrain_model_forward.2} parent=47 // pred_check
        %p306 = pneg %p305
      $region50: #{pretrain_model_forward.2} parent=47 // pred_check_branch
        %308 = sbr.rel (%p306) target = $region52
      $region51: #{pretrain_model_forward.2} parent=47 // pred_region
        %309 = vst [vmem:[#allocation2] sm:$0xff] 0.0
        %310 = vst [vmem:[#allocation2 + $0x8] sm:$0xff] 0.0
        %311 = vst [vmem:[#allocation2 + $0x10] sm:$0xff] 0.0
        %312 = vst [vmem:[#allocation2 + $0x18] sm:$0xff] 0.0
        %313 = vst [vmem:[#allocation2 + $0x20] sm:$0xff] 0.0
        %314 = vst [vmem:[#allocation2 + $0x28] sm:$0xff] 0.0
        %315 = vst [vmem:[#allocation2 + $0x30] sm:$0xff] 0.0
        %316 = vst [vmem:[#allocation2 + $0x38] sm:$0xff] 0.0
        %317 = vst [vmem:[#allocation2 + $0x40] sm:$0xff] 0.0
        %318 = vst [vmem:[#allocation2 + $0x48] sm:$0xff] 0.0
      $region52: #{pretrain_model_forward.2} parent=47 // pred_fallthru
        _
      %v319 = vld [vmem:[%s298] sm:$0xf]
      %v320 = vld [vmem:[%s298 + $0x4] sm:$0xf]
      %v321 = vld [vmem:[%s298 + $0x8] sm:$0xf]
      %v322 = vld [vmem:[%s298 + $0xc] sm:$0xf]
      %v323 = vld [vmem:[%s298 + $0x10] sm:$0xf]
      %v324 = vld [vmem:[%s298 + $0x14] sm:$0xf]
      %v325 = vld [vmem:[%s298 + $0x18] sm:$0xf]
      %v326 = vld [vmem:[%s298 + $0x1c] sm:$0xf]
      %v327 = vld [vmem:[%s1] sm:$0xf]
      %v328 = vld [vmem:[%s1 + $0x4] sm:$0xf]
      %v329 = vld [vmem:[%s1 + $0x8] sm:$0xf]
      %v330 = vld [vmem:[%s1 + $0xc] sm:$0xf]
      %v331 = vld [vmem:[%s2] sm:$0x1]
      %v333 = vlaneseq
      %v334 = vshrl.u32 %v333, 7
      %v335 = vsub.s32 0, %v334
      %v336 = vrot.slane %v331, %v335
      %v346 = vunpack.c.l.b16 %v319
      %v347 = vunpack.c.l.b16 %v320
      %v348 = vunpack.c.l.b16 %v321
      %v349 = vunpack.c.l.b16 %v322
      %v350 = vunpack.c.l.b16 %v323
      %v351 = vunpack.c.l.b16 %v324
      %v352 = vunpack.c.l.b16 %v325
      %v353 = vunpack.c.l.b16 %v326
      %v354 = vpack.c.b16 %v347, %v346
      %v355 = vpack.c.b16 %v349, %v348
      %v356 = vpack.c.b16 %v351, %v350
      %v357 = vpack.c.b16 %v353, %v352
      %v362 = vunpack.c.l.b16 %v327
      %v363 = vunpack.c.l.b16 %v328
      %v364 = vunpack.c.l.b16 %v329
      %v365 = vunpack.c.l.b16 %v330
      %v366 = vpack.c.b16 %v363, %v362
      %v367 = vpack.c.b16 %v365, %v364
      %vm370 = vcmask 261120
      %v372 = vsel %vm370, %v354, 0
      %v375 = vsel %vm370, %v355, 0
      %v378 = vsel %vm370, %v356, 0
      %v381 = vsel %vm370, %v357, 0
      %383 = vmatprep.subr.bf16.mxu0 0
      %384 = vmatpush1.bf16.msra.mxu0 %v366
      %385 = vmatprep.subr.bf16.mxu0 0
      %386 = vmatpush1.bf16.msra.mxu0 %v367
      %387 = vmatprep.subr.bf16.mxu0 0
      %388 = vmatpush1.bf16.msra.mxu0 0
      %389 = vmatprep.subr.bf16.mxu0 0
      %390 = vmatpush1.bf16.msra.mxu0 0
      %391 = vmatprep.subr.bf16.mxu0 0
      %392 = vmatpush1.bf16.msra.mxu0 0
      %393 = vmatprep.subr.bf16.mxu0 0
      %394 = vmatpush1.bf16.msra.mxu0 0
      %395 = vmatprep.subr.bf16.mxu0 0
      %396 = vmatpush1.bf16.msra.mxu0 0
      %397 = vmatprep.subr.bf16.mxu0 0
      %398 = vmatpush1.bf16.msra.mxu0 0
      %399 = vmatprep.subr.bf16.mxu0 0
      %400 = vmatpush1.bf16.msra.mxu0 0
      %401 = vmatprep.subr.bf16.mxu0 0
      %402 = vmatpush1.bf16.msra.mxu0 0
      %403 = vmatprep.subr.bf16.mxu0 0
      %404 = vmatpush1.bf16.msra.mxu0 0
      %405 = vmatprep.subr.bf16.mxu0 0
      %406 = vmatpush1.bf16.msra.mxu0 0
      %407 = vmatprep.subr.bf16.mxu0 0
      %408 = vmatpush1.bf16.msra.mxu0 0
      %409 = vmatprep.subr.bf16.mxu0 0
      %410 = vmatpush1.bf16.msra.mxu0 0
      %411 = vmatprep.subr.bf16.mxu0 0
      %412 = vmatpush1.bf16.msra.mxu0 0
      %413 = vmatprep.subr.bf16.mxu0 0
      %414 = vmatpush1.bf16.msra.mxu0 0
      %415 = vmatprep.mubr.bf16.mxu0 0
      %416 = vmatmul.mubr.bf16.gmra.mrb[0].mxu0 %v372
      %v417 = vpop.f32.mrb[0].mxu0
      %v418 = vadd.f32 %v336, %v417
      %v419 = vpop.f32.mrb[0].mxu0
      %v420 = vpop.f32.mrb[0].mxu0
      %v421 = vadd.f32 %v336, %v420
      %v422 = vpop.f32.mrb[0].mxu0
      %423 = vmatprep.mubr.bf16.mxu0 0
      %424 = vmatmul.mubr.bf16.gmra.mrb[0].mxu0 %v375
      %v425 = vpop.f32.mrb[0].mxu0
      %v426 = vadd.f32 %v336, %v425
      %v427 = vpop.f32.mrb[0].mxu0
      %v428 = vpop.f32.mrb[0].mxu0
      %v429 = vadd.f32 %v336, %v428
      %v430 = vpop.f32.mrb[0].mxu0
      %431 = vmatprep.mubr.bf16.mxu0 0
      %432 = vmatmul.mubr.bf16.gmra.mrb[0].mxu0 %v378
      %v433 = vpop.f32.mrb[0].mxu0
      %v434 = vadd.f32 %v336, %v433
      %v435 = vpop.f32.mrb[0].mxu0
      %v436 = vpop.f32.mrb[0].mxu0
      %v437 = vadd.f32 %v336, %v436
      %v438 = vpop.f32.mrb[0].mxu0
      %439 = vmatprep.mubr.bf16.mxu0 0
      %440 = vmatmul.mubr.bf16.gmra.mrb[0].mxu0 %v381
      %v441 = vpop.f32.mrb[0].mxu0
      %v442 = vadd.f32 %v336, %v441
      %v443 = vpop.f32.mrb[0].mxu0
      %v444 = vpop.f32.mrb[0].mxu0
      %v445 = vadd.f32 %v336, %v444
      %v446 = vpop.f32.mrb[0].mxu0
      %447 = vdwg.mxu0
      %v448 = vxor.u32 %v418, 2147483648
      %v449 = vxor.u32 %v421, 2147483648
      %v450 = vxor.u32 %v426, 2147483648
      %v451 = vxor.u32 %v429, 2147483648
      %v452 = vxor.u32 %v434, 2147483648
      %v453 = vxor.u32 %v437, 2147483648
      %v454 = vxor.u32 %v442, 2147483648
      %v455 = vxor.u32 %v445, 2147483648
      %v456 = vmul.f32 %v448, 1.442695
      %v457 = vpow.pop %v456
      %v458 = vmul.f32 %v449, 1.442695
      %v459 = vpow.pop %v458
      %v460 = vmul.f32 %v450, 1.442695
      %v461 = vpow.pop %v460
      %v462 = vmul.f32 %v451, 1.442695
      %v463 = vpow.pop %v462
      %v464 = vmul.f32 %v452, 1.442695
      %v465 = vpow.pop %v464
      %v466 = vmul.f32 %v453, 1.442695
      %v467 = vpow.pop %v466
      %v468 = vmul.f32 %v454, 1.442695
      %v469 = vpow.pop %v468
      %v470 = vmul.f32 %v455, 1.442695
      %v471 = vpow.pop %v470
      %v472 = vadd.f32 %v457, 1.0
      %v473 = vadd.f32 %v459, 1.0
      %v474 = vadd.f32 %v461, 1.0
      %v475 = vadd.f32 %v463, 1.0
      %v476 = vadd.f32 %v465, 1.0
      %v477 = vadd.f32 %v467, 1.0
      %v478 = vadd.f32 %v469, 1.0
      %v479 = vadd.f32 %v471, 1.0
      %v480 = vrcp.pop %v472
      %v481 = vmul.f32 1.0, %v480
      %v482 = vrcp.pop %v473
      %v483 = vmul.f32 1.0, %v482
      %v484 = vrcp.pop %v474
      %v485 = vmul.f32 1.0, %v484
      %v486 = vrcp.pop %v475
      %v487 = vmul.f32 1.0, %v486
      %v488 = vrcp.pop %v476
      %v489 = vmul.f32 1.0, %v488
      %v490 = vrcp.pop %v477
      %v491 = vmul.f32 1.0, %v490
      %v492 = vrcp.pop %v478
      %v493 = vmul.f32 1.0, %v492
      %v494 = vrcp.pop %v479
      %v495 = vmul.f32 1.0, %v494
      %v496 = vmul.f32 %v418, %v481
      %v497 = vmul.f32 %v421, %v483
      %v498 = vmul.f32 %v426, %v485
      %v499 = vmul.f32 %v429, %v487
      %v500 = vmul.f32 %v434, %v489
      %v501 = vmul.f32 %v437, %v491
      %v502 = vmul.f32 %v442, %v493
      %v503 = vmul.f32 %v445, %v495
      %v504 = vpack.c.bf16 %v497, %v496
      %v505 = vpack.c.bf16 %v499, %v498
      %v506 = vpack.c.bf16 %v501, %v500
      %v507 = vpack.c.bf16 %v503, %v502
      %v508 = vld [vmem:[%s3] sm:$0xff]
      %v509 = vld [vmem:[%s3 + $0x8] sm:$0xff]
      %v510 = vld [vmem:[%s3 + $0x10] sm:$0xff]
      %v511 = vld [vmem:[%s3 + $0x18] sm:$0xff]
      %v512 = vld [vmem:[%s3 + $0x20] sm:$0xff]
      %v513 = vld [vmem:[%s3 + $0x28] sm:$0xff]
      %v514 = vld [vmem:[%s3 + $0x30] sm:$0xff]
      %v515 = vld [vmem:[%s3 + $0x38] sm:$0xff]
      %v516 = vld [vmem:[%s3 + $0x40] sm:$0xff]
      %v517 = vld [vmem:[%s3 + $0x48] sm:$0xff]
      %v518 = vld [vmem:[%s3 + $0x50] sm:$0xff]
      %v519 = vld [vmem:[%s3 + $0x58] sm:$0xff]
      %v520 = vld [vmem:[%s3 + $0x60] sm:$0xff]
      %v521 = vld [vmem:[%s3 + $0x68] sm:$0xff]
      %v522 = vld [vmem:[%s3 + $0x70] sm:$0xff]
      %v523 = vld [vmem:[%s3 + $0x78] sm:$0xff]
      %v524 = vld [vmem:[%s3 + $0x80] sm:$0xff]
      %v525 = vld [vmem:[%s3 + $0x88] sm:$0xff]
      %v526 = vld [vmem:[%s3 + $0x90] sm:$0xff]
      %v527 = vld [vmem:[%s3 + $0x98] sm:$0xff]
      %v528 = vld [vmem:[%s4] sm:$0xff]
      %v529 = vld [vmem:[%s4 + $0x8] sm:$0x3]
      %v532 = vlaneseq
      %v533 = vshrl.u32 %v532, 7
      %v534 = vsub.s32 0, %v533
      %v535 = vrot.slane %v528, %v534
      %v536 = vlaneseq
      %v537 = vshrl.u32 %v536, 7
      %v538 = vsub.s32 1, %v537
      %v539 = vrot.slane %v528, %v538
      %v540 = vlaneseq
      %v541 = vshrl.u32 %v540, 7
      %v542 = vsub.s32 2, %v541
      %v543 = vrot.slane %v528, %v542
      %v544 = vlaneseq
      %v545 = vshrl.u32 %v544, 7
      %v546 = vsub.s32 3, %v545
      %v547 = vrot.slane %v528, %v546
      %v548 = vlaneseq
      %v549 = vshrl.u32 %v548, 7
      %v550 = vsub.s32 4, %v549
      %v551 = vrot.slane %v528, %v550
      %v552 = vlaneseq
      %v553 = vshrl.u32 %v552, 7
      %v554 = vsub.s32 5, %v553
      %v555 = vrot.slane %v528, %v554
      %v556 = vlaneseq
      %v557 = vshrl.u32 %v556, 7
      %v558 = vsub.s32 6, %v557
      %v559 = vrot.slane %v528, %v558
      %v560 = vlaneseq
      %v561 = vshrl.u32 %v560, 7
      %v562 = vsub.s32 7, %v561
      %v563 = vrot.slane %v528, %v562
      %v564 = vlaneseq
      %v565 = vshrl.u32 %v564, 7
      %v566 = vsub.s32 0, %v565
      %v567 = vrot.slane %v529, %v566
      %v568 = vlaneseq
      %v569 = vshrl.u32 %v568, 7
      %v570 = vsub.s32 1, %v569
      %v571 = vrot.slane %v529, %v570
      %v602 = vunpack.c.l.b16 %v508
      %v603 = vunpack.c.h.b16 %v508
      %v604 = vunpack.c.l.b16 %v509
      %v605 = vunpack.c.h.b16 %v509
      %v606 = vunpack.c.l.b16 %v510
      %v607 = vunpack.c.h.b16 %v510
      %v608 = vunpack.c.l.b16 %v511
      %v609 = vunpack.c.h.b16 %v511
      %v610 = vunpack.c.l.b16 %v512
      %v611 = vunpack.c.h.b16 %v512
      %v612 = vunpack.c.l.b16 %v513
      %v613 = vunpack.c.h.b16 %v513
      %v614 = vunpack.c.l.b16 %v514
      %v615 = vunpack.c.h.b16 %v514
      %v616 = vunpack.c.l.b16 %v515
      %v617 = vunpack.c.h.b16 %v515
      %v618 = vunpack.c.l.b16 %v516
      %v619 = vunpack.c.h.b16 %v516
      %v620 = vunpack.c.l.b16 %v517
      %v621 = vunpack.c.h.b16 %v517
      %v622 = vunpack.c.l.b16 %v518
      %v623 = vunpack.c.h.b16 %v518
      %v624 = vunpack.c.l.b16 %v519
      %v625 = vunpack.c.h.b16 %v519
      %v626 = vunpack.c.l.b16 %v520
      %v627 = vunpack.c.h.b16 %v520
      %v628 = vunpack.c.l.b16 %v521
      %v629 = vunpack.c.h.b16 %v521
      %v630 = vunpack.c.l.b16 %v522
      %v631 = vunpack.c.h.b16 %v522
      %v632 = vunpack.c.l.b16 %v523
      %v633 = vunpack.c.h.b16 %v523
      %v634 = vunpack.c.l.b16 %v524
      %v635 = vunpack.c.h.b16 %v524
      %v636 = vunpack.c.l.b16 %v525
      %v637 = vunpack.c.h.b16 %v525
      %v638 = vunpack.c.l.b16 %v526
      %v639 = vunpack.c.h.b16 %v526
      %v640 = vunpack.c.l.b16 %v527
      %v641 = vunpack.c.h.b16 %v527
      %v642 = vpack.c.b16 %v612, %v602
      %v643 = vpack.c.b16 %v613, %v603
      %v644 = vpack.c.b16 %v614, %v604
      %v645 = vpack.c.b16 %v615, %v605
      %v646 = vpack.c.b16 %v616, %v606
      %v647 = vpack.c.b16 %v617, %v607
      %v648 = vpack.c.b16 %v618, %v608
      %v649 = vpack.c.b16 %v619, %v609
      %v650 = vpack.c.b16 %v620, %v610
      %v651 = vpack.c.b16 %v621, %v611
      %v652 = vpack.c.b16 %v632, %v622
      %v653 = vpack.c.b16 %v633, %v623
      %v654 = vpack.c.b16 %v634, %v624
      %v655 = vpack.c.b16 %v635, %v625
      %v656 = vpack.c.b16 %v636, %v626
      %v657 = vpack.c.b16 %v637, %v627
      %v658 = vpack.c.b16 %v638, %v628
      %v659 = vpack.c.b16 %v639, %v629
      %v660 = vpack.c.b16 %v640, %v630
      %v661 = vpack.c.b16 %v641, %v631
      %v683 = vsel %vm370, %v504, 0
      %v686 = vsel %vm370, %v505, 0
      %v689 = vsel %vm370, %v506, 0
      %v692 = vsel %vm370, %v507, 0
      %694 = vmatprep.subr.bf16.mxu0 %v643
      %695 = vmatpush1.bf16.msra.mxu0 %v642
      %696 = vmatprep.subr.bf16.mxu0 %v653
      %697 = vmatpush1.bf16.msra.mxu0 %v652
      %698 = vmatprep.subr.bf16.mxu0 0
      %699 = vmatpush1.bf16.msra.mxu0 0
      %700 = vmatprep.subr.bf16.mxu0 0
      %701 = vmatpush1.bf16.msra.mxu0 0
      %702 = vmatprep.subr.bf16.mxu0 0
      %703 = vmatpush1.bf16.msra.mxu0 0
      %704 = vmatprep.subr.bf16.mxu0 0
      %705 = vmatpush1.bf16.msra.mxu0 0
      %706 = vmatprep.subr.bf16.mxu0 0
      %707 = vmatpush1.bf16.msra.mxu0 0
      %708 = vmatprep.subr.bf16.mxu0 0
      %709 = vmatpush1.bf16.msra.mxu0 0
      %710 = vmatprep.subr.bf16.mxu0 0
      %711 = vmatpush1.bf16.msra.mxu0 0
      %712 = vmatprep.subr.bf16.mxu0 0
      %713 = vmatpush1.bf16.msra.mxu0 0
      %714 = vmatprep.subr.bf16.mxu0 0
      %715 = vmatpush1.bf16.msra.mxu0 0
      %716 = vmatprep.subr.bf16.mxu0 0
      %717 = vmatpush1.bf16.msra.mxu0 0
      %718 = vmatprep.subr.bf16.mxu0 0
      %719 = vmatpush1.bf16.msra.mxu0 0
      %720 = vmatprep.subr.bf16.mxu0 0
      %721 = vmatpush1.bf16.msra.mxu0 0
      %722 = vmatprep.subr.bf16.mxu0 0
      %723 = vmatpush1.bf16.msra.mxu0 0
      %724 = vmatprep.subr.bf16.mxu0 0
      %725 = vmatpush1.bf16.msra.mxu0 0
      %726 = vmatprep.mubr.bf16.mxu0 0
      %727 = vmatmul.mubr.bf16.gmra.mrb[0].mxu0 %v683
      %v728 = vpop.f32.mrb[0].mxu0
      %v729 = vadd.f32 %v535, %v728
      %v730 = vpop.f32.mrb[0].mxu0
      %v731 = vadd.f32 %v539, %v730
      %v732 = vpop.f32.mrb[0].mxu0
      %v733 = vadd.f32 %v535, %v732
      %v734 = vpop.f32.mrb[0].mxu0
      %v735 = vadd.f32 %v539, %v734
      %736 = vmatprep.mubr.bf16.mxu0 0
      %737 = vmatmul.mubr.bf16.gmra.mrb[0].mxu0 %v686
      %v738 = vpop.f32.mrb[0].mxu0
      %v739 = vadd.f32 %v535, %v738
      %v740 = vpop.f32.mrb[0].mxu0
      %v741 = vadd.f32 %v539, %v740
      %v742 = vpop.f32.mrb[0].mxu0
      %v743 = vadd.f32 %v535, %v742
      %v744 = vpop.f32.mrb[0].mxu0
      %v745 = vadd.f32 %v539, %v744
      %746 = vmatprep.mubr.bf16.mxu0 0
      %747 = vmatmul.mubr.bf16.gmra.mrb[0].mxu0 %v689
      %v748 = vpop.f32.mrb[0].mxu0
      %v749 = vadd.f32 %v535, %v748
      %v750 = vpop.f32.mrb[0].mxu0
      %v751 = vadd.f32 %v539, %v750
      %v752 = vpop.f32.mrb[0].mxu0
      %v753 = vadd.f32 %v535, %v752
      %v754 = vpop.f32.mrb[0].mxu0
      %v755 = vadd.f32 %v539, %v754
      %756 = vmatprep.mubr.bf16.mxu0 0
      %757 = vmatmul.mubr.bf16.gmra.mrb[0].mxu0 %v692
      %v758 = vpop.f32.mrb[0].mxu0
      %v759 = vadd.f32 %v535, %v758
      %v760 = vpop.f32.mrb[0].mxu0
      %v761 = vadd.f32 %v539, %v760
      %v762 = vpop.f32.mrb[0].mxu0
      %v763 = vadd.f32 %v535, %v762
      %v764 = vpop.f32.mrb[0].mxu0
      %v765 = vadd.f32 %v539, %v764
      %766 = vdwg.mxu0
      %767 = vmatprep.subr.bf16.mxu0 %v645
      %768 = vmatpush1.bf16.msra.mxu0 %v644
      %769 = vmatprep.subr.bf16.mxu0 %v655
      %770 = vmatpush1.bf16.msra.mxu0 %v654
      %771 = vmatprep.subr.bf16.mxu0 0
      %772 = vmatpush1.bf16.msra.mxu0 0
      %773 = vmatprep.subr.bf16.mxu0 0
      %774 = vmatpush1.bf16.msra.mxu0 0
      %775 = vmatprep.subr.bf16.mxu0 0
      %776 = vmatpush1.bf16.msra.mxu0 0
      %777 = vmatprep.subr.bf16.mxu0 0
      %778 = vmatpush1.bf16.msra.mxu0 0
      %779 = vmatprep.subr.bf16.mxu0 0
      %780 = vmatpush1.bf16.msra.mxu0 0
      %781 = vmatprep.subr.bf16.mxu0 0
      %782 = vmatpush1.bf16.msra.mxu0 0
      %783 = vmatprep.subr.bf16.mxu0 0
      %784 = vmatpush1.bf16.msra.mxu0 0
      %785 = vmatprep.subr.bf16.mxu0 0
      %786 = vmatpush1.bf16.msra.mxu0 0
      %787 = vmatprep.subr.bf16.mxu0 0
      %788 = vmatpush1.bf16.msra.mxu0 0
      %789 = vmatprep.subr.bf16.mxu0 0
      %790 = vmatpush1.bf16.msra.mxu0 0
      %791 = vmatprep.subr.bf16.mxu0 0
      %792 = vmatpush1.bf16.msra.mxu0 0
      %793 = vmatprep.subr.bf16.mxu0 0
      %794 = vmatpush1.bf16.msra.mxu0 0
      %795 = vmatprep.subr.bf16.mxu0 0
      %796 = vmatpush1.bf16.msra.mxu0 0
      %797 = vmatprep.subr.bf16.mxu0 0
      %798 = vmatpush1.bf16.msra.mxu0 0
      %799 = vmatprep.mubr.bf16.mxu0 0
      %800 = vmatmul.mubr.bf16.gmra.mrb[0].mxu0 %v683
      %v801 = vpop.f32.mrb[0].mxu0
      %v802 = vadd.f32 %v543, %v801
      %v803 = vpop.f32.mrb[0].mxu0
      %v804 = vadd.f32 %v547, %v803
      %v805 = vpop.f32.mrb[0].mxu0
      %v806 = vadd.f32 %v543, %v805
      %v807 = vpop.f32.mrb[0].mxu0
      %v808 = vadd.f32 %v547, %v807
      %809 = vmatprep.mubr.bf16.mxu0 0
      %810 = vmatmul.mubr.bf16.gmra.mrb[0].mxu0 %v686
      %v811 = vpop.f32.mrb[0].mxu0
      %v812 = vadd.f32 %v543, %v811
      %v813 = vpop.f32.mrb[0].mxu0
      %v814 = vadd.f32 %v547, %v813
      %v815 = vpop.f32.mrb[0].mxu0
      %v816 = vadd.f32 %v543, %v815
      %v817 = vpop.f32.mrb[0].mxu0
      %v818 = vadd.f32 %v547, %v817
      %819 = vmatprep.mubr.bf16.mxu0 0
      %820 = vmatmul.mubr.bf16.gmra.mrb[0].mxu0 %v689
      %v821 = vpop.f32.mrb[0].mxu0
      %v822 = vadd.f32 %v543, %v821
      %v823 = vpop.f32.mrb[0].mxu0
      %v824 = vadd.f32 %v547, %v823
      %v825 = vpop.f32.mrb[0].mxu0
      %v826 = vadd.f32 %v543, %v825
      %v827 = vpop.f32.mrb[0].mxu0
      %v828 = vadd.f32 %v547, %v827
      %829 = vmatprep.mubr.bf16.mxu0 0
      %830 = vmatmul.mubr.bf16.gmra.mrb[0].mxu0 %v692
      %v831 = vpop.f32.mrb[0].mxu0
      %v832 = vadd.f32 %v543, %v831
      %v833 = vpop.f32.mrb[0].mxu0
      %v834 = vadd.f32 %v547, %v833
      %v835 = vpop.f32.mrb[0].mxu0
      %v836 = vadd.f32 %v543, %v835
      %v837 = vpop.f32.mrb[0].mxu0
      %v838 = vadd.f32 %v547, %v837
      %839 = vdwg.mxu0
      %840 = vmatprep.subr.bf16.mxu0 %v647
      %841 = vmatpush1.bf16.msra.mxu0 %v646
      %842 = vmatprep.subr.bf16.mxu0 %v657
      %843 = vmatpush1.bf16.msra.mxu0 %v656
      %844 = vmatprep.subr.bf16.mxu0 0
      %845 = vmatpush1.bf16.msra.mxu0 0
      %846 = vmatprep.subr.bf16.mxu0 0
      %847 = vmatpush1.bf16.msra.mxu0 0
      %848 = vmatprep.subr.bf16.mxu0 0
      %849 = vmatpush1.bf16.msra.mxu0 0
      %850 = vmatprep.subr.bf16.mxu0 0
      %851 = vmatpush1.bf16.msra.mxu0 0
      %852 = vmatprep.subr.bf16.mxu0 0
      %853 = vmatpush1.bf16.msra.mxu0 0
      %854 = vmatprep.subr.bf16.mxu0 0
      %855 = vmatpush1.bf16.msra.mxu0 0
      %856 = vmatprep.subr.bf16.mxu0 0
      %857 = vmatpush1.bf16.msra.mxu0 0
      %858 = vmatprep.subr.bf16.mxu0 0
      %859 = vmatpush1.bf16.msra.mxu0 0
      %860 = vmatprep.subr.bf16.mxu0 0
      %861 = vmatpush1.bf16.msra.mxu0 0
      %862 = vmatprep.subr.bf16.mxu0 0
      %863 = vmatpush1.bf16.msra.mxu0 0
      %864 = vmatprep.subr.bf16.mxu0 0
      %865 = vmatpush1.bf16.msra.mxu0 0
      %866 = vmatprep.subr.bf16.mxu0 0
      %867 = vmatpush1.bf16.msra.mxu0 0
      %868 = vmatprep.subr.bf16.mxu0 0
      %869 = vmatpush1.bf16.msra.mxu0 0
      %870 = vmatprep.subr.bf16.mxu0 0
      %871 = vmatpush1.bf16.msra.mxu0 0
      %872 = vmatprep.mubr.bf16.mxu0 0
      %873 = vmatmul.mubr.bf16.gmra.mrb[0].mxu0 %v683
      %v874 = vpop.f32.mrb[0].mxu0
      %v875 = vadd.f32 %v551, %v874
      %v876 = vpop.f32.mrb[0].mxu0
      %v877 = vadd.f32 %v555, %v876
      %v878 = vpop.f32.mrb[0].mxu0
      %v879 = vadd.f32 %v551, %v878
      %v880 = vpop.f32.mrb[0].mxu0
      %v881 = vadd.f32 %v555, %v880
      %882 = vmatprep.mubr.bf16.mxu0 0
      %883 = vmatmul.mubr.bf16.gmra.mrb[0].mxu0 %v686
      %v884 = vpop.f32.mrb[0].mxu0
      %v885 = vadd.f32 %v551, %v884
      %v886 = vpop.f32.mrb[0].mxu0
      %v887 = vadd.f32 %v555, %v886
      %v888 = vpop.f32.mrb[0].mxu0
      %v889 = vadd.f32 %v551, %v888
      %v890 = vpop.f32.mrb[0].mxu0
      %v891 = vadd.f32 %v555, %v890
      %892 = vmatprep.mubr.bf16.mxu0 0
      %893 = vmatmul.mubr.bf16.gmra.mrb[0].mxu0 %v689
      %v894 = vpop.f32.mrb[0].mxu0
      %v895 = vadd.f32 %v551, %v894
      %v896 = vpop.f32.mrb[0].mxu0
      %v897 = vadd.f32 %v555, %v896
      %v898 = vpop.f32.mrb[0].mxu0
      %v899 = vadd.f32 %v551, %v898
      %v900 = vpop.f32.mrb[0].mxu0
      %v901 = vadd.f32 %v555, %v900
      %902 = vmatprep.mubr.bf16.mxu0 0
      %903 = vmatmul.mubr.bf16.gmra.mrb[0].mxu0 %v692
      %v904 = vpop.f32.mrb[0].mxu0
      %v905 = vadd.f32 %v551, %v904
      %v906 = vpop.f32.mrb[0].mxu0
      %v907 = vadd.f32 %v555, %v906
      %v908 = vpop.f32.mrb[0].mxu0
      %v909 = vadd.f32 %v551, %v908
      %v910 = vpop.f32.mrb[0].mxu0
      %v911 = vadd.f32 %v555, %v910
      %912 = vdwg.mxu0
      %913 = vmatprep.subr.bf16.mxu0 %v649
      %914 = vmatpush1.bf16.msra.mxu0 %v648
      %915 = vmatprep.subr.bf16.mxu0 %v659
      %916 = vmatpush1.bf16.msra.mxu0 %v658
      %917 = vmatprep.subr.bf16.mxu0 0
      %918 = vmatpush1.bf16.msra.mxu0 0
      %919 = vmatprep.subr.bf16.mxu0 0
      %920 = vmatpush1.bf16.msra.mxu0 0
      %921 = vmatprep.subr.bf16.mxu0 0
      %922 = vmatpush1.bf16.msra.mxu0 0
      %923 = vmatprep.subr.bf16.mxu0 0
      %924 = vmatpush1.bf16.msra.mxu0 0
      %925 = vmatprep.subr.bf16.mxu0 0
      %926 = vmatpush1.bf16.msra.mxu0 0
      %927 = vmatprep.subr.bf16.mxu0 0
      %928 = vmatpush1.bf16.msra.mxu0 0
      %929 = vmatprep.subr.bf16.mxu0 0
      %930 = vmatpush1.bf16.msra.mxu0 0
      %931 = vmatprep.subr.bf16.mxu0 0
      %932 = vmatpush1.bf16.msra.mxu0 0
      %933 = vmatprep.subr.bf16.mxu0 0
      %934 = vmatpush1.bf16.msra.mxu0 0
      %935 = vmatprep.subr.bf16.mxu0 0
      %936 = vmatpush1.bf16.msra.mxu0 0
      %937 = vmatprep.subr.bf16.mxu0 0
      %938 = vmatpush1.bf16.msra.mxu0 0
      %939 = vmatprep.subr.bf16.mxu0 0
      %940 = vmatpush1.bf16.msra.mxu0 0
      %941 = vmatprep.subr.bf16.mxu0 0
      %942 = vmatpush1.bf16.msra.mxu0 0
      %943 = vmatprep.subr.bf16.mxu0 0
      %944 = vmatpush1.bf16.msra.mxu0 0
      %945 = vmatprep.mubr.bf16.mxu0 0
      %946 = vmatmul.mubr.bf16.gmra.mrb[0].mxu0 %v683
      %v947 = vpop.f32.mrb[0].mxu0
      %v948 = vadd.f32 %v559, %v947
      %v949 = vpop.f32.mrb[0].mxu0
      %v950 = vadd.f32 %v563, %v949
      %v951 = vpop.f32.mrb[0].mxu0
      %v952 = vadd.f32 %v559, %v951
      %v953 = vpop.f32.mrb[0].mxu0
      %v954 = vadd.f32 %v563, %v953
      %955 = vmatprep.mubr.bf16.mxu0 0
      %956 = vmatmul.mubr.bf16.gmra.mrb[0].mxu0 %v686
      %v957 = vpop.f32.mrb[0].mxu0
      %v958 = vadd.f32 %v559, %v957
      %v959 = vpop.f32.mrb[0].mxu0
      %v960 = vadd.f32 %v563, %v959
      %v961 = vpop.f32.mrb[0].mxu0
      %v962 = vadd.f32 %v559, %v961
      %v963 = vpop.f32.mrb[0].mxu0
      %v964 = vadd.f32 %v563, %v963
      %965 = vmatprep.mubr.bf16.mxu0 0
      %966 = vmatmul.mubr.bf16.gmra.mrb[0].mxu0 %v689
      %v967 = vpop.f32.mrb[0].mxu0
      %v968 = vadd.f32 %v559, %v967
      %v969 = vpop.f32.mrb[0].mxu0
      %v970 = vadd.f32 %v563, %v969
      %v971 = vpop.f32.mrb[0].mxu0
      %v972 = vadd.f32 %v559, %v971
      %v973 = vpop.f32.mrb[0].mxu0
      %v974 = vadd.f32 %v563, %v973
      %975 = vmatprep.mubr.bf16.mxu0 0
      %976 = vmatmul.mubr.bf16.gmra.mrb[0].mxu0 %v692
      %v977 = vpop.f32.mrb[0].mxu0
      %v978 = vadd.f32 %v559, %v977
      %v979 = vpop.f32.mrb[0].mxu0
      %v980 = vadd.f32 %v563, %v979
      %v981 = vpop.f32.mrb[0].mxu0
      %v982 = vadd.f32 %v559, %v981
      %v983 = vpop.f32.mrb[0].mxu0
      %v984 = vadd.f32 %v563, %v983
      %985 = vdwg.mxu0
      %986 = vmatprep.subr.bf16.mxu0 %v651
      %987 = vmatpush1.bf16.msra.mxu0 %v650
      %988 = vmatprep.subr.bf16.mxu0 %v661
      %989 = vmatpush1.bf16.msra.mxu0 %v660
      %990 = vmatprep.subr.bf16.mxu0 0
      %991 = vmatpush1.bf16.msra.mxu0 0
      %992 = vmatprep.subr.bf16.mxu0 0
      %993 = vmatpush1.bf16.msra.mxu0 0
      %994 = vmatprep.subr.bf16.mxu0 0
      %995 = vmatpush1.bf16.msra.mxu0 0
      %996 = vmatprep.subr.bf16.mxu0 0
      %997 = vmatpush1.bf16.msra.mxu0 0
      %998 = vmatprep.subr.bf16.mxu0 0
      %999 = vmatpush1.bf16.msra.mxu0 0
      %1000 = vmatprep.subr.bf16.mxu0 0
      %1001 = vmatpush1.bf16.msra.mxu0 0
      %1002 = vmatprep.subr.bf16.mxu0 0
      %1003 = vmatpush1.bf16.msra.mxu0 0
      %1004 = vmatprep.subr.bf16.mxu0 0
      %1005 = vmatpush1.bf16.msra.mxu0 0
      %1006 = vmatprep.subr.bf16.mxu0 0
      %1007 = vmatpush1.bf16.msra.mxu0 0
      %1008 = vmatprep.subr.bf16.mxu0 0
      %1009 = vmatpush1.bf16.msra.mxu0 0
      %1010 = vmatprep.subr.bf16.mxu0 0
      %1011 = vmatpush1.bf16.msra.mxu0 0
      %1012 = vmatprep.subr.bf16.mxu0 0
      %1013 = vmatpush1.bf16.msra.mxu0 0
      %1014 = vmatprep.subr.bf16.mxu0 0
      %1015 = vmatpush1.bf16.msra.mxu0 0
      %1016 = vmatprep.subr.bf16.mxu0 0
      %1017 = vmatpush1.bf16.msra.mxu0 0
      %1018 = vmatprep.mubr.bf16.mxu0 0
      %1019 = vmatmul.mubr.bf16.gmra.mrb[0].mxu0 %v683
      %v1020 = vpop.f32.mrb[0].mxu0
      %v1021 = vadd.f32 %v567, %v1020
      %v1022 = vpop.f32.mrb[0].mxu0
      %v1023 = vadd.f32 %v571, %v1022
      %v1024 = vpop.f32.mrb[0].mxu0
      %v1025 = vadd.f32 %v567, %v1024
      %v1026 = vpop.f32.mrb[0].mxu0
      %v1027 = vadd.f32 %v571, %v1026
      %1028 = vmatprep.mubr.bf16.mxu0 0
      %1029 = vmatmul.mubr.bf16.gmra.mrb[0].mxu0 %v686
      %v1030 = vpop.f32.mrb[0].mxu0
      %v1031 = vadd.f32 %v567, %v1030
      %v1032 = vpop.f32.mrb[0].mxu0
      %v1033 = vadd.f32 %v571, %v1032
      %v1034 = vpop.f32.mrb[0].mxu0
      %v1035 = vadd.f32 %v567, %v1034
      %v1036 = vpop.f32.mrb[0].mxu0
      %v1037 = vadd.f32 %v571, %v1036
      %1038 = vmatprep.mubr.bf16.mxu0 0
      %1039 = vmatmul.mubr.bf16.gmra.mrb[0].mxu0 %v689
      %v1040 = vpop.f32.mrb[0].mxu0
      %v1041 = vadd.f32 %v567, %v1040
      %v1042 = vpop.f32.mrb[0].mxu0
      %v1043 = vadd.f32 %v571, %v1042
      %v1044 = vpop.f32.mrb[0].mxu0
      %v1045 = vadd.f32 %v567, %v1044
      %v1046 = vpop.f32.mrb[0].mxu0
      %v1047 = vadd.f32 %v571, %v1046
      %1048 = vmatprep.mubr.bf16.mxu0 0
      %1049 = vmatmul.mubr.bf16.gmra.mrb[0].mxu0 %v692
      %v1050 = vpop.f32.mrb[0].mxu0
      %v1051 = vadd.f32 %v567, %v1050
      %v1052 = vpop.f32.mrb[0].mxu0
      %v1053 = vadd.f32 %v571, %v1052
      %v1054 = vpop.f32.mrb[0].mxu0
      %v1055 = vadd.f32 %v567, %v1054
      %v1056 = vpop.f32.mrb[0].mxu0
      %v1057 = vadd.f32 %v571, %v1056
      %1058 = vdwg.mxu0
      %v1059 = vpack.c.bf16 %v733, %v729
      %v1060 = vpack.c.bf16 %v735, %v731
      %v1061 = vpack.c.bf16 %v806, %v802
      %v1062 = vpack.c.bf16 %v808, %v804
      %v1063 = vpack.c.bf16 %v879, %v875
      %v1064 = vpack.c.bf16 %v881, %v877
      %v1065 = vpack.c.bf16 %v952, %v948
      %v1066 = vpack.c.bf16 %v954, %v950
      %v1067 = vpack.c.bf16 %v1025, %v1021
      %v1068 = vpack.c.bf16 %v1027, %v1023
      %v1069 = vpack.c.bf16 %v743, %v739
      %v1070 = vpack.c.bf16 %v745, %v741
      %v1071 = vpack.c.bf16 %v816, %v812
      %v1072 = vpack.c.bf16 %v818, %v814
      %v1073 = vpack.c.bf16 %v889, %v885
      %v1074 = vpack.c.bf16 %v891, %v887
      %v1075 = vpack.c.bf16 %v962, %v958
      %v1076 = vpack.c.bf16 %v964, %v960
      %v1077 = vpack.c.bf16 %v1035, %v1031
      %v1078 = vpack.c.bf16 %v1037, %v1033
      %v1079 = vpack.c.bf16 %v753, %v749
      %v1080 = vpack.c.bf16 %v755, %v751
      %v1081 = vpack.c.bf16 %v826, %v822
      %v1082 = vpack.c.bf16 %v828, %v824
      %v1083 = vpack.c.bf16 %v899, %v895
      %v1084 = vpack.c.bf16 %v901, %v897
      %v1085 = vpack.c.bf16 %v972, %v968
      %v1086 = vpack.c.bf16 %v974, %v970
      %v1087 = vpack.c.bf16 %v1045, %v1041
      %v1088 = vpack.c.bf16 %v1047, %v1043
      %v1089 = vpack.c.bf16 %v763, %v759
      %v1090 = vpack.c.bf16 %v765, %v761
      %v1091 = vpack.c.bf16 %v836, %v832
      %v1092 = vpack.c.bf16 %v838, %v834
      %v1093 = vpack.c.bf16 %v909, %v905
      %v1094 = vpack.c.bf16 %v911, %v907
      %v1095 = vpack.c.bf16 %v982, %v978
      %v1096 = vpack.c.bf16 %v984, %v980
      %v1097 = vpack.c.bf16 %v1055, %v1051
      %v1098 = vpack.c.bf16 %v1057, %v1053
      %v1099 = vxor.u32 %v1059, 2147516416
      %v1100 = vxor.u32 %v1060, 2147516416
      %v1101 = vxor.u32 %v1061, 2147516416
      %v1102 = vxor.u32 %v1062, 2147516416
      %v1103 = vxor.u32 %v1063, 2147516416
      %v1104 = vxor.u32 %v1064, 2147516416
      %v1105 = vxor.u32 %v1065, 2147516416
      %v1106 = vxor.u32 %v1066, 2147516416
      %v1107 = vxor.u32 %v1067, 2147516416
      %v1108 = vxor.u32 %v1068, 2147516416
      %v1109 = vxor.u32 %v1069, 2147516416
      %v1110 = vxor.u32 %v1070, 2147516416
      %v1111 = vxor.u32 %v1071, 2147516416
      %v1112 = vxor.u32 %v1072, 2147516416
      %v1113 = vxor.u32 %v1073, 2147516416
      %v1114 = vxor.u32 %v1074, 2147516416
      %v1115 = vxor.u32 %v1075, 2147516416
      %v1116 = vxor.u32 %v1076, 2147516416
      %v1117 = vxor.u32 %v1077, 2147516416
      %v1118 = vxor.u32 %v1078, 2147516416
      %v1119 = vxor.u32 %v1079, 2147516416
      %v1120 = vxor.u32 %v1080, 2147516416
      %v1121 = vxor.u32 %v1081, 2147516416
      %v1122 = vxor.u32 %v1082, 2147516416
      %v1123 = vxor.u32 %v1083, 2147516416
      %v1124 = vxor.u32 %v1084, 2147516416
      %v1125 = vxor.u32 %v1085, 2147516416
      %v1126 = vxor.u32 %v1086, 2147516416
      %v1127 = vxor.u32 %v1087, 2147516416
      %v1128 = vxor.u32 %v1088, 2147516416
      %v1129 = vxor.u32 %v1089, 2147516416
      %v1130 = vxor.u32 %v1090, 2147516416
      %v1131 = vxor.u32 %v1091, 2147516416
      %v1132 = vxor.u32 %v1092, 2147516416
      %v1133 = vxor.u32 %v1093, 2147516416
      %v1134 = vxor.u32 %v1094, 2147516416
      %v1135 = vxor.u32 %v1095, 2147516416
      %v1136 = vxor.u32 %v1096, 2147516416
      %v1137 = vxor.u32 %v1097, 2147516416
      %v1138 = vxor.u32 %v1098, 2147516416
      %v1140 = vmul.bf16 %v1099, 1069105081
      %v1141 = vpow.bf16.pop %v1140
      %v1143 = vmul.bf16 %v1100, 1069105081
      %v1144 = vpow.bf16.pop %v1143
      %v1146 = vmul.bf16 %v1101, 1069105081
      %v1147 = vpow.bf16.pop %v1146
      %v1149 = vmul.bf16 %v1102, 1069105081
      %v1150 = vpow.bf16.pop %v1149
      %v1152 = vmul.bf16 %v1103, 1069105081
      %v1153 = vpow.bf16.pop %v1152
      %v1155 = vmul.bf16 %v1104, 1069105081
      %v1156 = vpow.bf16.pop %v1155
      %v1158 = vmul.bf16 %v1105, 1069105081
      %v1159 = vpow.bf16.pop %v1158
      %v1161 = vmul.bf16 %v1106, 1069105081
      %v1162 = vpow.bf16.pop %v1161
      %v1164 = vmul.bf16 %v1107, 1069105081
      %v1165 = vpow.bf16.pop %v1164
      %v1167 = vmul.bf16 %v1108, 1069105081
      %v1168 = vpow.bf16.pop %v1167
      %v1170 = vmul.bf16 %v1109, 1069105081
      %v1171 = vpow.bf16.pop %v1170
      %v1173 = vmul.bf16 %v1110, 1069105081
      %v1174 = vpow.bf16.pop %v1173
      %v1176 = vmul.bf16 %v1111, 1069105081
      %v1177 = vpow.bf16.pop %v1176
      %v1179 = vmul.bf16 %v1112, 1069105081
      %v1180 = vpow.bf16.pop %v1179
      %v1182 = vmul.bf16 %v1113, 1069105081
      %v1183 = vpow.bf16.pop %v1182
      %v1185 = vmul.bf16 %v1114, 1069105081
      %v1186 = vpow.bf16.pop %v1185
      %v1188 = vmul.bf16 %v1115, 1069105081
      %v1189 = vpow.bf16.pop %v1188
      %v1191 = vmul.bf16 %v1116, 1069105081
      %v1192 = vpow.bf16.pop %v1191
      %v1194 = vmul.bf16 %v1117, 1069105081
      %v1195 = vpow.bf16.pop %v1194
      %v1197 = vmul.bf16 %v1118, 1069105081
      %v1198 = vpow.bf16.pop %v1197
      %v1200 = vmul.bf16 %v1119, 1069105081
      %v1201 = vpow.bf16.pop %v1200
      %v1203 = vmul.bf16 %v1120, 1069105081
      %v1204 = vpow.bf16.pop %v1203
      %v1206 = vmul.bf16 %v1121, 1069105081
      %v1207 = vpow.bf16.pop %v1206
      %v1209 = vmul.bf16 %v1122, 1069105081
      %v1210 = vpow.bf16.pop %v1209
      %v1212 = vmul.bf16 %v1123, 1069105081
      %v1213 = vpow.bf16.pop %v1212
      %v1215 = vmul.bf16 %v1124, 1069105081
      %v1216 = vpow.bf16.pop %v1215
      %v1218 = vmul.bf16 %v1125, 1069105081
      %v1219 = vpow.bf16.pop %v1218
      %v1221 = vmul.bf16 %v1126, 1069105081
      %v1222 = vpow.bf16.pop %v1221
      %v1224 = vmul.bf16 %v1127, 1069105081
      %v1225 = vpow.bf16.pop %v1224
      %v1227 = vmul.bf16 %v1128, 1069105081
      %v1228 = vpow.bf16.pop %v1227
      %v1230 = vmul.bf16 %v1129, 1069105081
      %v1231 = vpow.bf16.pop %v1230
      %v1233 = vmul.bf16 %v1130, 1069105081
      %v1234 = vpow.bf16.pop %v1233
      %v1236 = vmul.bf16 %v1131, 1069105081
      %v1237 = vpow.bf16.pop %v1236
      %v1239 = vmul.bf16 %v1132, 1069105081
      %v1240 = vpow.bf16.pop %v1239
      %v1242 = vmul.bf16 %v1133, 1069105081
      %v1243 = vpow.bf16.pop %v1242
      %v1245 = vmul.bf16 %v1134, 1069105081
      %v1246 = vpow.bf16.pop %v1245
      %v1248 = vmul.bf16 %v1135, 1069105081
      %v1249 = vpow.bf16.pop %v1248
      %v1251 = vmul.bf16 %v1136, 1069105081
      %v1252 = vpow.bf16.pop %v1251
      %v1254 = vmul.bf16 %v1137, 1069105081
      %v1255 = vpow.bf16.pop %v1254
      %v1257 = vmul.bf16 %v1138, 1069105081
      %v1258 = vpow.bf16.pop %v1257
      %v1259 = vadd.bf16 %v1141, 1065369472
      %v1260 = vadd.bf16 %v1144, 1065369472
      %v1261 = vadd.bf16 %v1147, 1065369472
      %v1262 = vadd.bf16 %v1150, 1065369472
      %v1263 = vadd.bf16 %v1153, 1065369472
      %v1264 = vadd.bf16 %v1156, 1065369472
      %v1265 = vadd.bf16 %v1159, 1065369472
      %v1266 = vadd.bf16 %v1162, 1065369472
      %v1267 = vadd.bf16 %v1165, 1065369472
      %v1268 = vadd.bf16 %v1168, 1065369472
      %v1269 = vadd.bf16 %v1171, 1065369472
      %v1270 = vadd.bf16 %v1174, 1065369472
      %v1271 = vadd.bf16 %v1177, 1065369472
      %v1272 = vadd.bf16 %v1180, 1065369472
      %v1273 = vadd.bf16 %v1183, 1065369472
      %v1274 = vadd.bf16 %v1186, 1065369472
      %v1275 = vadd.bf16 %v1189, 1065369472
      %v1276 = vadd.bf16 %v1192, 1065369472
      %v1277 = vadd.bf16 %v1195, 1065369472
      %v1278 = vadd.bf16 %v1198, 1065369472
      %v1279 = vadd.bf16 %v1201, 1065369472
      %v1280 = vadd.bf16 %v1204, 1065369472
      %v1281 = vadd.bf16 %v1207, 1065369472
      %v1282 = vadd.bf16 %v1210, 1065369472
      %v1283 = vadd.bf16 %v1213, 1065369472
      %v1284 = vadd.bf16 %v1216, 1065369472
      %v1285 = vadd.bf16 %v1219, 1065369472
      %v1286 = vadd.bf16 %v1222, 1065369472
      %v1287 = vadd.bf16 %v1225, 1065369472
      %v1288 = vadd.bf16 %v1228, 1065369472
      %v1289 = vadd.bf16 %v1231, 1065369472
      %v1290 = vadd.bf16 %v1234, 1065369472
      %v1291 = vadd.bf16 %v1237, 1065369472
      %v1292 = vadd.bf16 %v1240, 1065369472
      %v1293 = vadd.bf16 %v1243, 1065369472
      %v1294 = vadd.bf16 %v1246, 1065369472
      %v1295 = vadd.bf16 %v1249, 1065369472
      %v1296 = vadd.bf16 %v1252, 1065369472
      %v1297 = vadd.bf16 %v1255, 1065369472
      %v1298 = vadd.bf16 %v1258, 1065369472
      %v1299 = vrcp.bf16.pop %v1259
      %v1300 = vmul.bf16 1065369472, %v1299
      %v1301 = vrcp.bf16.pop %v1260
      %v1302 = vmul.bf16 1065369472, %v1301
      %v1303 = vrcp.bf16.pop %v1261
      %v1304 = vmul.bf16 1065369472, %v1303
      %v1305 = vrcp.bf16.pop %v1262
      %v1306 = vmul.bf16 1065369472, %v1305
      %v1307 = vrcp.bf16.pop %v1263
      %v1308 = vmul.bf16 1065369472, %v1307
      %v1309 = vrcp.bf16.pop %v1264
      %v1310 = vmul.bf16 1065369472, %v1309
      %v1311 = vrcp.bf16.pop %v1265
      %v1312 = vmul.bf16 1065369472, %v1311
      %v1313 = vrcp.bf16.pop %v1266
      %v1314 = vmul.bf16 1065369472, %v1313
      %v1315 = vrcp.bf16.pop %v1267
      %v1316 = vmul.bf16 1065369472, %v1315
      %v1317 = vrcp.bf16.pop %v1268
      %v1318 = vmul.bf16 1065369472, %v1317
      %v1319 = vrcp.bf16.pop %v1269
      %v1320 = vmul.bf16 1065369472, %v1319
      %v1321 = vrcp.bf16.pop %v1270
      %v1322 = vmul.bf16 1065369472, %v1321
      %v1323 = vrcp.bf16.pop %v1271
      %v1324 = vmul.bf16 1065369472, %v1323
      %v1325 = vrcp.bf16.pop %v1272
      %v1326 = vmul.bf16 1065369472, %v1325
      %v1327 = vrcp.bf16.pop %v1273
      %v1328 = vmul.bf16 1065369472, %v1327
      %v1329 = vrcp.bf16.pop %v1274
      %v1330 = vmul.bf16 1065369472, %v1329
      %v1331 = vrcp.bf16.pop %v1275
      %v1332 = vmul.bf16 1065369472, %v1331
      %v1333 = vrcp.bf16.pop %v1276
      %v1334 = vmul.bf16 1065369472, %v1333
      %v1335 = vrcp.bf16.pop %v1277
      %v1336 = vmul.bf16 1065369472, %v1335
      %v1337 = vrcp.bf16.pop %v1278
      %v1338 = vmul.bf16 1065369472, %v1337
      %v1339 = vrcp.bf16.pop %v1279
      %v1340 = vmul.bf16 1065369472, %v1339
      %v1341 = vrcp.bf16.pop %v1280
      %v1342 = vmul.bf16 1065369472, %v1341
      %v1343 = vrcp.bf16.pop %v1281
      %v1344 = vmul.bf16 1065369472, %v1343
      %v1345 = vrcp.bf16.pop %v1282
      %v1346 = vmul.bf16 1065369472, %v1345
      %v1347 = vrcp.bf16.pop %v1283
      %v1348 = vmul.bf16 1065369472, %v1347
      %v1349 = vrcp.bf16.pop %v1284
      %v1350 = vmul.bf16 1065369472, %v1349
      %v1351 = vrcp.bf16.pop %v1285
      %v1352 = vmul.bf16 1065369472, %v1351
      %v1353 = vrcp.bf16.pop %v1286
      %v1354 = vmul.bf16 1065369472, %v1353
      %v1355 = vrcp.bf16.pop %v1287
      %v1356 = vmul.bf16 1065369472, %v1355
      %v1357 = vrcp.bf16.pop %v1288
      %v1358 = vmul.bf16 1065369472, %v1357
      %v1359 = vrcp.bf16.pop %v1289
      %v1360 = vmul.bf16 1065369472, %v1359
      %v1361 = vrcp.bf16.pop %v1290
      %v1362 = vmul.bf16 1065369472, %v1361
      %v1363 = vrcp.bf16.pop %v1291
      %v1364 = vmul.bf16 1065369472, %v1363
      %v1365 = vrcp.bf16.pop %v1292
      %v1366 = vmul.bf16 1065369472, %v1365
      %v1367 = vrcp.bf16.pop %v1293
      %v1368 = vmul.bf16 1065369472, %v1367
      %v1369 = vrcp.bf16.pop %v1294
      %v1370 = vmul.bf16 1065369472, %v1369
      %v1371 = vrcp.bf16.pop %v1295
      %v1372 = vmul.bf16 1065369472, %v1371
      %v1373 = vrcp.bf16.pop %v1296
      %v1374 = vmul.bf16 1065369472, %v1373
      %v1375 = vrcp.bf16.pop %v1297
      %v1376 = vmul.bf16 1065369472, %v1375
      %v1377 = vrcp.bf16.pop %v1298
      %v1378 = vmul.bf16 1065369472, %v1377
      %v1379 = vunpack.c.l.bf16 %v1300
      %v1380 = vunpack.c.l.bf16 %v1302
      %v1381 = vunpack.c.l.bf16 %v1304
      %v1382 = vunpack.c.l.bf16 %v1306
      %v1383 = vunpack.c.l.bf16 %v1308
      %v1384 = vunpack.c.l.bf16 %v1310
      %v1385 = vunpack.c.l.bf16 %v1312
      %v1386 = vunpack.c.l.bf16 %v1314
      %v1387 = vunpack.c.l.bf16 %v1316
      %v1388 = vunpack.c.l.bf16 %v1318
      %v1389 = vunpack.c.h.bf16 %v1300
      %v1390 = vunpack.c.h.bf16 %v1302
      %v1391 = vunpack.c.h.bf16 %v1304
      %v1392 = vunpack.c.h.bf16 %v1306
      %v1393 = vunpack.c.h.bf16 %v1308
      %v1394 = vunpack.c.h.bf16 %v1310
      %v1395 = vunpack.c.h.bf16 %v1312
      %v1396 = vunpack.c.h.bf16 %v1314
      %v1397 = vunpack.c.h.bf16 %v1316
      %v1398 = vunpack.c.h.bf16 %v1318
      %v1399 = vunpack.c.l.bf16 %v1320
      %v1400 = vunpack.c.l.bf16 %v1322
      %v1401 = vunpack.c.l.bf16 %v1324
      %v1402 = vunpack.c.l.bf16 %v1326
      %v1403 = vunpack.c.l.bf16 %v1328
      %v1404 = vunpack.c.l.bf16 %v1330
      %v1405 = vunpack.c.l.bf16 %v1332
      %v1406 = vunpack.c.l.bf16 %v1334
      %v1407 = vunpack.c.l.bf16 %v1336
      %v1408 = vunpack.c.l.bf16 %v1338
      %v1409 = vunpack.c.h.bf16 %v1320
      %v1410 = vunpack.c.h.bf16 %v1322
      %v1411 = vunpack.c.h.bf16 %v1324
      %v1412 = vunpack.c.h.bf16 %v1326
      %v1413 = vunpack.c.h.bf16 %v1328
      %v1414 = vunpack.c.h.bf16 %v1330
      %v1415 = vunpack.c.h.bf16 %v1332
      %v1416 = vunpack.c.h.bf16 %v1334
      %v1417 = vunpack.c.h.bf16 %v1336
      %v1418 = vunpack.c.h.bf16 %v1338
      %v1419 = vunpack.c.l.bf16 %v1340
      %v1420 = vunpack.c.l.bf16 %v1342
      %v1421 = vunpack.c.l.bf16 %v1344
      %v1422 = vunpack.c.l.bf16 %v1346
      %v1423 = vunpack.c.l.bf16 %v1348
      %v1424 = vunpack.c.l.bf16 %v1350
      %v1425 = vunpack.c.l.bf16 %v1352
      %v1426 = vunpack.c.l.bf16 %v1354
      %v1427 = vunpack.c.l.bf16 %v1356
      %v1428 = vunpack.c.l.bf16 %v1358
      %v1429 = vunpack.c.h.bf16 %v1340
      %v1430 = vunpack.c.h.bf16 %v1342
      %v1431 = vunpack.c.h.bf16 %v1344
      %v1432 = vunpack.c.h.bf16 %v1346
      %v1433 = vunpack.c.h.bf16 %v1348
      %v1434 = vunpack.c.h.bf16 %v1350
      %v1435 = vunpack.c.h.bf16 %v1352
      %v1436 = vunpack.c.h.bf16 %v1354
      %v1437 = vunpack.c.h.bf16 %v1356
      %v1438 = vunpack.c.h.bf16 %v1358
      %v1439 = vunpack.c.l.bf16 %v1360
      %v1440 = vunpack.c.l.bf16 %v1362
      %v1441 = vunpack.c.l.bf16 %v1364
      %v1442 = vunpack.c.l.bf16 %v1366
      %v1443 = vunpack.c.l.bf16 %v1368
      %v1444 = vunpack.c.l.bf16 %v1370
      %v1445 = vunpack.c.l.bf16 %v1372
      %v1446 = vunpack.c.l.bf16 %v1374
      %v1447 = vunpack.c.l.bf16 %v1376
      %v1448 = vunpack.c.l.bf16 %v1378
      %v1449 = vunpack.c.h.bf16 %v1360
      %v1450 = vunpack.c.h.bf16 %v1362
      %v1451 = vunpack.c.h.bf16 %v1364
      %v1452 = vunpack.c.h.bf16 %v1366
      %v1453 = vunpack.c.h.bf16 %v1368
      %v1454 = vunpack.c.h.bf16 %v1370
      %v1455 = vunpack.c.h.bf16 %v1372
      %v1456 = vunpack.c.h.bf16 %v1374
      %v1457 = vunpack.c.h.bf16 %v1376
      %v1458 = vunpack.c.h.bf16 %v1378
      %v1459 = vmul.f32 %v729, %v1379
      %v1460 = vmul.f32 %v731, %v1380
      %v1461 = vmul.f32 %v802, %v1381
      %v1462 = vmul.f32 %v804, %v1382
      %v1463 = vmul.f32 %v875, %v1383
      %v1464 = vmul.f32 %v877, %v1384
      %v1465 = vmul.f32 %v948, %v1385
      %v1466 = vmul.f32 %v950, %v1386
      %v1467 = vmul.f32 %v1021, %v1387
      %v1468 = vmul.f32 %v1023, %v1388
      %v1469 = vmul.f32 %v733, %v1389
      %v1470 = vmul.f32 %v735, %v1390
      %v1471 = vmul.f32 %v806, %v1391
      %v1472 = vmul.f32 %v808, %v1392
      %v1473 = vmul.f32 %v879, %v1393
      %v1474 = vmul.f32 %v881, %v1394
      %v1475 = vmul.f32 %v952, %v1395
      %v1476 = vmul.f32 %v954, %v1396
      %v1477 = vmul.f32 %v1025, %v1397
      %v1478 = vmul.f32 %v1027, %v1398
      %v1479 = vmul.f32 %v739, %v1399
      %v1480 = vmul.f32 %v741, %v1400
      %v1481 = vmul.f32 %v812, %v1401
      %v1482 = vmul.f32 %v814, %v1402
      %v1483 = vmul.f32 %v885, %v1403
      %v1484 = vmul.f32 %v887, %v1404
      %v1485 = vmul.f32 %v958, %v1405
      %v1486 = vmul.f32 %v960, %v1406
      %v1487 = vmul.f32 %v1031, %v1407
      %v1488 = vmul.f32 %v1033, %v1408
      %v1489 = vmul.f32 %v743, %v1409
      %v1490 = vmul.f32 %v745, %v1410
      %v1491 = vmul.f32 %v816, %v1411
      %v1492 = vmul.f32 %v818, %v1412
      %v1493 = vmul.f32 %v889, %v1413
      %v1494 = vmul.f32 %v891, %v1414
      %v1495 = vmul.f32 %v962, %v1415
      %v1496 = vmul.f32 %v964, %v1416
      %v1497 = vmul.f32 %v1035, %v1417
      %v1498 = vmul.f32 %v1037, %v1418
      %v1499 = vmul.f32 %v749, %v1419
      %v1500 = vmul.f32 %v751, %v1420
      %v1501 = vmul.f32 %v822, %v1421
      %v1502 = vmul.f32 %v824, %v1422
      %v1503 = vmul.f32 %v895, %v1423
      %v1504 = vmul.f32 %v897, %v1424
      %v1505 = vmul.f32 %v968, %v1425
      %v1506 = vmul.f32 %v970, %v1426
      %v1507 = vmul.f32 %v1041, %v1427
      %v1508 = vmul.f32 %v1043, %v1428
      %v1509 = vmul.f32 %v753, %v1429
      %v1510 = vmul.f32 %v755, %v1430
      %v1511 = vmul.f32 %v826, %v1431
      %v1512 = vmul.f32 %v828, %v1432
      %v1513 = vmul.f32 %v899, %v1433
      %v1514 = vmul.f32 %v901, %v1434
      %v1515 = vmul.f32 %v972, %v1435
      %v1516 = vmul.f32 %v974, %v1436
      %v1517 = vmul.f32 %v1045, %v1437
      %v1518 = vmul.f32 %v1047, %v1438
      %v1519 = vmul.f32 %v759, %v1439
      %v1520 = vmul.f32 %v761, %v1440
      %v1521 = vmul.f32 %v832, %v1441
      %v1522 = vmul.f32 %v834, %v1442
      %v1523 = vmul.f32 %v905, %v1443
      %v1524 = vmul.f32 %v907, %v1444
      %v1525 = vmul.f32 %v978, %v1445
      %v1526 = vmul.f32 %v980, %v1446
      %v1527 = vmul.f32 %v1051, %v1447
      %v1528 = vmul.f32 %v1053, %v1448
      %v1529 = vmul.f32 %v763, %v1449
      %v1530 = vmul.f32 %v765, %v1450
      %v1531 = vmul.f32 %v836, %v1451
      %v1532 = vmul.f32 %v838, %v1452
      %v1533 = vmul.f32 %v909, %v1453
      %v1534 = vmul.f32 %v911, %v1454
      %v1535 = vmul.f32 %v982, %v1455
      %v1536 = vmul.f32 %v984, %v1456
      %v1537 = vmul.f32 %v1055, %v1457
      %v1538 = vmul.f32 %v1057, %v1458
      %v1539 = vld [vmem:[#allocation2] sm:$0xff]
      %v1540 = vld [vmem:[#allocation2 + $0x8] sm:$0xff]
      %v1541 = vld [vmem:[#allocation2 + $0x10] sm:$0xff]
      %v1542 = vld [vmem:[#allocation2 + $0x18] sm:$0xff]
      %v1543 = vld [vmem:[#allocation2 + $0x20] sm:$0xff]
      %v1544 = vld [vmem:[#allocation2 + $0x28] sm:$0xff]
      %v1545 = vld [vmem:[#allocation2 + $0x30] sm:$0xff]
      %v1546 = vld [vmem:[#allocation2 + $0x38] sm:$0xff]
      %v1547 = vld [vmem:[#allocation2 + $0x40] sm:$0xff]
      %v1548 = vld [vmem:[#allocation2 + $0x48] sm:$0xff]
      %v1549 = vadd.f32 %v1459, %v1469
      %v1550 = vadd.f32 %v1549, %v1479
      %v1551 = vadd.f32 %v1550, %v1489
      %v1552 = vadd.f32 %v1551, %v1499
      %v1553 = vadd.f32 %v1552, %v1509
      %v1554 = vadd.f32 %v1553, %v1519
      %v1555 = vadd.f32 %v1554, %v1529
      %v1556 = vadd.f32 %v1460, %v1470
      %v1557 = vadd.f32 %v1556, %v1480
      %v1558 = vadd.f32 %v1557, %v1490
      %v1559 = vadd.f32 %v1558, %v1500
      %v1560 = vadd.f32 %v1559, %v1510
      %v1561 = vadd.f32 %v1560, %v1520
      %v1562 = vadd.f32 %v1561, %v1530
      %v1563 = vadd.f32 %v1461, %v1471
      %v1564 = vadd.f32 %v1563, %v1481
      %v1565 = vadd.f32 %v1564, %v1491
      %v1566 = vadd.f32 %v1565, %v1501
      %v1567 = vadd.f32 %v1566, %v1511
      %v1568 = vadd.f32 %v1567, %v1521
      %v1569 = vadd.f32 %v1568, %v1531
      %v1570 = vadd.f32 %v1462, %v1472
      %v1571 = vadd.f32 %v1570, %v1482
      %v1572 = vadd.f32 %v1571, %v1492
      %v1573 = vadd.f32 %v1572, %v1502
      %v1574 = vadd.f32 %v1573, %v1512
      %v1575 = vadd.f32 %v1574, %v1522
      %v1576 = vadd.f32 %v1575, %v1532
      %v1577 = vadd.f32 %v1463, %v1473
      %v1578 = vadd.f32 %v1577, %v1483
      %v1579 = vadd.f32 %v1578, %v1493
      %v1580 = vadd.f32 %v1579, %v1503
      %v1581 = vadd.f32 %v1580, %v1513
      %v1582 = vadd.f32 %v1581, %v1523
      %v1583 = vadd.f32 %v1582, %v1533
      %v1584 = vadd.f32 %v1464, %v1474
      %v1585 = vadd.f32 %v1584, %v1484
      %v1586 = vadd.f32 %v1585, %v1494
      %v1587 = vadd.f32 %v1586, %v1504
      %v1588 = vadd.f32 %v1587, %v1514
      %v1589 = vadd.f32 %v1588, %v1524
      %v1590 = vadd.f32 %v1589, %v1534
      %v1591 = vadd.f32 %v1465, %v1475
      %v1592 = vadd.f32 %v1591, %v1485
      %v1593 = vadd.f32 %v1592, %v1495
      %v1594 = vadd.f32 %v1593, %v1505
      %v1595 = vadd.f32 %v1594, %v1515
      %v1596 = vadd.f32 %v1595, %v1525
      %v1597 = vadd.f32 %v1596, %v1535
      %v1598 = vadd.f32 %v1466, %v1476
      %v1599 = vadd.f32 %v1598, %v1486
      %v1600 = vadd.f32 %v1599, %v1496
      %v1601 = vadd.f32 %v1600, %v1506
      %v1602 = vadd.f32 %v1601, %v1516
      %v1603 = vadd.f32 %v1602, %v1526
      %v1604 = vadd.f32 %v1603, %v1536
      %v1605 = vadd.f32 %v1467, %v1477
      %v1606 = vadd.f32 %v1605, %v1487
      %v1607 = vadd.f32 %v1606, %v1497
      %v1608 = vadd.f32 %v1607, %v1507
      %v1609 = vadd.f32 %v1608, %v1517
      %v1610 = vadd.f32 %v1609, %v1527
      %v1611 = vadd.f32 %v1610, %v1537
      %v1612 = vadd.f32 %v1468, %v1478
      %v1613 = vadd.f32 %v1612, %v1488
      %v1614 = vadd.f32 %v1613, %v1498
      %v1615 = vadd.f32 %v1614, %v1508
      %v1616 = vadd.f32 %v1615, %v1518
      %v1617 = vadd.f32 %v1616, %v1528
      %v1618 = vadd.f32 %v1617, %v1538
      %v1619 = vadd.f32 %v1539, %v1555
      %v1620 = vadd.f32 %v1540, %v1562
      %v1621 = vadd.f32 %v1541, %v1569
      %v1622 = vadd.f32 %v1542, %v1576
      %v1623 = vadd.f32 %v1543, %v1583
      %v1624 = vadd.f32 %v1544, %v1590
      %v1625 = vadd.f32 %v1545, %v1597
      %v1626 = vadd.f32 %v1546, %v1604
      %v1627 = vadd.f32 %v1547, %v1611
      %v1628 = vadd.f32 %v1548, %v1618
      %1629 = vst [vmem:[#allocation2] sm:$0xff] %v1619
      %1630 = vst [vmem:[#allocation2 + $0x8] sm:$0xff] %v1620
      %1631 = vst [vmem:[#allocation2 + $0x10] sm:$0xff] %v1621
      %1632 = vst [vmem:[#allocation2 + $0x18] sm:$0xff] %v1622
      %1633 = vst [vmem:[#allocation2 + $0x20] sm:$0xff] %v1623
      %1634 = vst [vmem:[#allocation2 + $0x28] sm:$0xff] %v1624
      %1635 = vst [vmem:[#allocation2 + $0x30] sm:$0xff] %v1625
      %1636 = vst [vmem:[#allocation2 + $0x38] sm:$0xff] %v1626
      %1637 = vst [vmem:[#allocation2 + $0x40] sm:$0xff] %v1627
      %1638 = vst [vmem:[#allocation2 + $0x48] sm:$0xff] %v1628
      // Predicated region
      $region53: #{pretrain_model_forward.2} parent=47 // pred_check
        %p1639 = pneg %p305
      $region54: #{pretrain_model_forward.2} parent=47 // pred_check_branch
        %1641 = sbr.rel (%p1639) target = $region56
      $region55: #{pretrain_model_forward.2} parent=47 // pred_region
        %v1642 = vld [vmem:[#allocation2] sm:$0xff]
        %v1643 = vld [vmem:[#allocation2 + $0x8] sm:$0xff]
        %v1644 = vld [vmem:[#allocation2 + $0x10] sm:$0xff]
        %v1645 = vld [vmem:[#allocation2 + $0x18] sm:$0xff]
        %v1646 = vld [vmem:[#allocation2 + $0x20] sm:$0xff]
        %v1647 = vld [vmem:[#allocation2 + $0x28] sm:$0xff]
        %v1648 = vld [vmem:[#allocation2 + $0x30] sm:$0xff]
        %v1649 = vld [vmem:[#allocation2 + $0x38] sm:$0xff]
        %v1650 = vld [vmem:[#allocation2 + $0x40] sm:$0xff]
        %v1651 = vld [vmem:[#allocation2 + $0x48] sm:$0xff]
        %v1652 = vrot.slane %v1642, 4
        %v1653 = vadd.f32 %v1642, %v1652
        %v1654 = vrot.slane %v1653, 2
        %v1655 = vadd.f32 %v1653, %v1654
        %v1656 = vrot.slane %v1655, 1
        %v1657 = vadd.f32 %v1655, %v1656
        %v1658 = vrot.slane %v1643, 4
        %v1659 = vadd.f32 %v1643, %v1658
        %v1660 = vrot.slane %v1659, 2
        %v1661 = vadd.f32 %v1659, %v1660
        %v1662 = vrot.slane %v1661, 1
        %v1663 = vadd.f32 %v1661, %v1662
        %v1664 = vrot.slane %v1644, 4
        %v1665 = vadd.f32 %v1644, %v1664
        %v1666 = vrot.slane %v1665, 2
        %v1667 = vadd.f32 %v1665, %v1666
        %v1668 = vrot.slane %v1667, 1
        %v1669 = vadd.f32 %v1667, %v1668
        %v1670 = vrot.slane %v1645, 4
        %v1671 = vadd.f32 %v1645, %v1670
        %v1672 = vrot.slane %v1671, 2
        %v1673 = vadd.f32 %v1671, %v1672
        %v1674 = vrot.slane %v1673, 1
        %v1675 = vadd.f32 %v1673, %v1674
        %v1676 = vrot.slane %v1646, 4
        %v1677 = vadd.f32 %v1646, %v1676
        %v1678 = vrot.slane %v1677, 2
        %v1679 = vadd.f32 %v1677, %v1678
        %v1680 = vrot.slane %v1679, 1
        %v1681 = vadd.f32 %v1679, %v1680
        %v1682 = vrot.slane %v1647, 4
        %v1683 = vadd.f32 %v1647, %v1682
        %v1684 = vrot.slane %v1683, 2
        %v1685 = vadd.f32 %v1683, %v1684
        %v1686 = vrot.slane %v1685, 1
        %v1687 = vadd.f32 %v1685, %v1686
        %v1688 = vrot.slane %v1648, 4
        %v1689 = vadd.f32 %v1648, %v1688
        %v1690 = vrot.slane %v1689, 2
        %v1691 = vadd.f32 %v1689, %v1690
        %v1692 = vrot.slane %v1691, 1
        %v1693 = vadd.f32 %v1691, %v1692
        %v1694 = vrot.slane %v1649, 4
        %v1695 = vadd.f32 %v1649, %v1694
        %v1696 = vrot.slane %v1695, 2
        %v1697 = vadd.f32 %v1695, %v1696
        %v1698 = vrot.slane %v1697, 1
        %v1699 = vadd.f32 %v1697, %v1698
        %v1700 = vrot.slane %v1650, 4
        %v1701 = vadd.f32 %v1650, %v1700
        %v1702 = vrot.slane %v1701, 2
        %v1703 = vadd.f32 %v1701, %v1702
        %v1704 = vrot.slane %v1703, 1
        %v1705 = vadd.f32 %v1703, %v1704
        %v1706 = vrot.slane %v1651, 4
        %v1707 = vadd.f32 %v1651, %v1706
        %v1708 = vrot.slane %v1707, 2
        %v1709 = vadd.f32 %v1707, %v1708
        %v1710 = vrot.slane %v1709, 1
        %v1711 = vadd.f32 %v1709, %v1710
        %v1712 = vmul.f32 %v1657, 0.015625
        %v1713 = vmul.f32 %v1663, 0.015625
        %v1714 = vmul.f32 %v1669, 0.015625
        %v1715 = vmul.f32 %v1675, 0.015625
        %v1716 = vmul.f32 %v1681, 0.015625
        %v1717 = vmul.f32 %v1687, 0.015625
        %v1718 = vmul.f32 %v1693, 0.015625
        %v1719 = vmul.f32 %v1699, 0.015625
        %v1720 = vmul.f32 %v1705, 0.015625
        %v1721 = vmul.f32 %v1711, 0.015625
        %v1722 = vpack.c.bf16 %v1712, %v1712
        %v1723 = vpack.c.bf16 %v1713, %v1713
        %v1724 = vpack.c.bf16 %v1714, %v1714
        %v1725 = vpack.c.bf16 %v1715, %v1715
        %v1726 = vpack.c.bf16 %v1716, %v1716
        %v1727 = vpack.c.bf16 %v1717, %v1717
        %v1728 = vpack.c.bf16 %v1718, %v1718
        %v1729 = vpack.c.bf16 %v1719, %v1719
        %v1730 = vpack.c.bf16 %v1720, %v1720
        %v1731 = vpack.c.bf16 %v1721, %v1721
        %v1732 = vld [vmem:[%s5] sm:$0xf]
        %v1733 = vld [vmem:[%s5 + $0x4] sm:$0xf]
        %v1734 = vld [vmem:[%s5 + $0x8] sm:$0xf]
        %v1735 = vld [vmem:[%s5 + $0xc] sm:$0xf]
        %v1736 = vld [vmem:[%s5 + $0x10] sm:$0xf]
        %v1737 = vld [vmem:[%s5 + $0x14] sm:$0xf]
        %v1738 = vld [vmem:[%s5 + $0x18] sm:$0xf]
        %v1739 = vld [vmem:[%s5 + $0x1c] sm:$0xf]
        %v1740 = vld [vmem:[%s5 + $0x20] sm:$0xf]
        %v1741 = vld [vmem:[%s5 + $0x24] sm:$0xf]
        %v1742 = vld [vmem:[%s5 + $0x28] sm:$0xf]
        %v1743 = vld [vmem:[%s5 + $0x2c] sm:$0xf]
        %v1744 = vld [vmem:[%s5 + $0x30] sm:$0xf]
        %v1745 = vld [vmem:[%s5 + $0x34] sm:$0xf]
        %v1746 = vld [vmem:[%s5 + $0x38] sm:$0xf]
        %v1747 = vld [vmem:[%s5 + $0x3c] sm:$0xf]
        %v1748 = vld [vmem:[%s5 + $0x40] sm:$0xf]
        %v1749 = vld [vmem:[%s5 + $0x44] sm:$0xf]
        %v1750 = vld [vmem:[%s5 + $0x48] sm:$0xf]
        %v1751 = vld [vmem:[%s5 + $0x4c] sm:$0xf]
        %v1752 = vld [vmem:[%s5 + $0x50] sm:$0xf]
        %v1753 = vld [vmem:[%s5 + $0x54] sm:$0xf]
        %v1754 = vld [vmem:[%s5 + $0x58] sm:$0xf]
        %v1755 = vld [vmem:[%s5 + $0x5c] sm:$0xf]
        %v1756 = vld [vmem:[%s5 + $0x60] sm:$0xf]
        %v1757 = vld [vmem:[%s5 + $0x64] sm:$0xf]
        %v1758 = vld [vmem:[%s5 + $0x68] sm:$0xf]
        %v1759 = vld [vmem:[%s5 + $0x6c] sm:$0xf]
        %v1760 = vld [vmem:[%s5 + $0x70] sm:$0xf]
        %v1761 = vld [vmem:[%s5 + $0x74] sm:$0xf]
        %v1762 = vld [vmem:[%s5 + $0x78] sm:$0xf]
        %v1763 = vld [vmem:[%s5 + $0x7c] sm:$0xf]
        %v1764 = vld [vmem:[%s5 + $0x80] sm:$0xf]
        %v1765 = vld [vmem:[%s5 + $0x84] sm:$0xf]
        %v1766 = vld [vmem:[%s5 + $0x88] sm:$0xf]
        %v1767 = vld [vmem:[%s5 + $0x8c] sm:$0xf]
        %v1768 = vld [vmem:[%s5 + $0x90] sm:$0xf]
        %v1769 = vld [vmem:[%s5 + $0x94] sm:$0xf]
        %v1770 = vld [vmem:[%s5 + $0x98] sm:$0xf]
        %v1771 = vld [vmem:[%s5 + $0x9c] sm:$0xf]
        %v1772 = vld [vmem:[%s5 + $0xa0] sm:$0xf]
        %v1773 = vld [vmem:[%s5 + $0xa4] sm:$0xf]
        %v1774 = vld [vmem:[%s5 + $0xa8] sm:$0xf]
        %v1775 = vld [vmem:[%s5 + $0xac] sm:$0xf]
        %v1776 = vld [vmem:[%s5 + $0xb0] sm:$0xf]
        %v1777 = vld [vmem:[%s5 + $0xb4] sm:$0xf]
        %v1778 = vld [vmem:[%s5 + $0xb8] sm:$0xf]
        %v1779 = vld [vmem:[%s5 + $0xbc] sm:$0xf]
        %v1780 = vld [vmem:[%s5 + $0xc0] sm:$0xf]
        %v1781 = vld [vmem:[%s5 + $0xc4] sm:$0xf]
        %v1782 = vld [vmem:[%s5 + $0xc8] sm:$0xf]
        %v1783 = vld [vmem:[%s5 + $0xcc] sm:$0xf]
        %v1784 = vld [vmem:[%s5 + $0xd0] sm:$0xf]
        %v1785 = vld [vmem:[%s5 + $0xd4] sm:$0xf]
        %v1786 = vld [vmem:[%s5 + $0xd8] sm:$0xf]
        %v1787 = vld [vmem:[%s5 + $0xdc] sm:$0xf]
        %v1788 = vld [vmem:[%s5 + $0xe0] sm:$0xf]
        %v1789 = vld [vmem:[%s5 + $0xe4] sm:$0xf]
        %v1790 = vld [vmem:[%s5 + $0xe8] sm:$0xf]
        %v1791 = vld [vmem:[%s5 + $0xec] sm:$0xf]
        %v1792 = vld [vmem:[%s5 + $0xf0] sm:$0xf]
        %v1793 = vld [vmem:[%s5 + $0xf4] sm:$0xf]
        %v1794 = vld [vmem:[%s5 + $0xf8] sm:$0xf]
        %v1795 = vld [vmem:[%s5 + $0xfc] sm:$0xf]
        %v1796 = vld [vmem:[%s5 + $0x100] sm:$0xf]
        %v1797 = vld [vmem:[%s5 + $0x104] sm:$0xf]
        %v1798 = vld [vmem:[%s5 + $0x108] sm:$0xf]
        %v1799 = vld [vmem:[%s5 + $0x10c] sm:$0xf]
        %v1800 = vld [vmem:[%s5 + $0x110] sm:$0xf]
        %v1801 = vld [vmem:[%s5 + $0x114] sm:$0xf]
        %v1802 = vld [vmem:[%s5 + $0x118] sm:$0xf]
        %v1803 = vld [vmem:[%s5 + $0x11c] sm:$0xf]
        %v1804 = vld [vmem:[%s5 + $0x120] sm:$0xf]
        %v1805 = vld [vmem:[%s5 + $0x124] sm:$0xf]
        %v1806 = vld [vmem:[%s5 + $0x128] sm:$0xf]
        %v1807 = vld [vmem:[%s5 + $0x12c] sm:$0xf]
        %v1808 = vld [vmem:[%s5 + $0x130] sm:$0xf]
        %v1809 = vld [vmem:[%s5 + $0x134] sm:$0xf]
        %v1810 = vld [vmem:[%s5 + $0x138] sm:$0xf]
        %v1811 = vld [vmem:[%s5 + $0x13c] sm:$0xf]
        %v1812 = vld [vmem:[%s5 + $0x140] sm:$0xf]
        %v1813 = vld [vmem:[%s5 + $0x144] sm:$0xf]
        %v1814 = vld [vmem:[%s5 + $0x148] sm:$0xf]
        %v1815 = vld [vmem:[%s5 + $0x14c] sm:$0xf]
        %v1816 = vld [vmem:[%s5 + $0x150] sm:$0xf]
        %v1817 = vld [vmem:[%s5 + $0x154] sm:$0xf]
        %v1818 = vld [vmem:[%s5 + $0x158] sm:$0xf]
        %v1819 = vld [vmem:[%s5 + $0x15c] sm:$0xf]
        %v1820 = vld [vmem:[%s5 + $0x160] sm:$0xf]
        %v1821 = vld [vmem:[%s5 + $0x164] sm:$0xf]
        %v1822 = vld [vmem:[%s5 + $0x168] sm:$0xf]
        %v1823 = vld [vmem:[%s5 + $0x16c] sm:$0xf]
        %v1824 = vld [vmem:[%s5 + $0x170] sm:$0xf]
        %v1825 = vld [vmem:[%s5 + $0x174] sm:$0xf]
        %v1826 = vld [vmem:[%s5 + $0x178] sm:$0xf]
        %v1827 = vld [vmem:[%s5 + $0x17c] sm:$0xf]
        %v1828 = vld [vmem:[%s5 + $0x180] sm:$0xf]
        %v1829 = vld [vmem:[%s5 + $0x184] sm:$0xf]
        %v1830 = vld [vmem:[%s5 + $0x188] sm:$0xf]
        %v1831 = vld [vmem:[%s5 + $0x18c] sm:$0xf]
        %v1832 = vld [vmem:[%s5 + $0x190] sm:$0xf]
        %v1833 = vld [vmem:[%s5 + $0x194] sm:$0xf]
        %v1834 = vld [vmem:[%s5 + $0x198] sm:$0xf]
        %v1835 = vld [vmem:[%s5 + $0x19c] sm:$0xf]
        %v1836 = vld [vmem:[%s5 + $0x1a0] sm:$0xf]
        %v1837 = vld [vmem:[%s5 + $0x1a4] sm:$0xf]
        %v1838 = vld [vmem:[%s5 + $0x1a8] sm:$0xf]
        %v1839 = vld [vmem:[%s5 + $0x1ac] sm:$0xf]
        %v1840 = vld [vmem:[%s5 + $0x1b0] sm:$0xf]
        %v1841 = vld [vmem:[%s5 + $0x1b4] sm:$0xf]
        %v1842 = vld [vmem:[%s5 + $0x1b8] sm:$0xf]
        %v1843 = vld [vmem:[%s5 + $0x1bc] sm:$0xf]
        %v1844 = vld [vmem:[%s5 + $0x1c0] sm:$0xf]
        %v1845 = vld [vmem:[%s5 + $0x1c4] sm:$0xf]
        %v1846 = vld [vmem:[%s5 + $0x1c8] sm:$0xf]
        %v1847 = vld [vmem:[%s5 + $0x1cc] sm:$0xf]
        %v1848 = vld [vmem:[%s5 + $0x1d0] sm:$0xf]
        %v1849 = vld [vmem:[%s5 + $0x1d4] sm:$0xf]
        %v1850 = vld [vmem:[%s5 + $0x1d8] sm:$0xf]
        %v1851 = vld [vmem:[%s5 + $0x1dc] sm:$0xf]
        %v1852 = vld [vmem:[%s5 + $0x1e0] sm:$0xf]
        %v1853 = vld [vmem:[%s5 + $0x1e4] sm:$0xf]
        %v1854 = vld [vmem:[%s5 + $0x1e8] sm:$0xf]
        %v1855 = vld [vmem:[%s5 + $0x1ec] sm:$0xf]
        %v1856 = vld [vmem:[%s5 + $0x1f0] sm:$0xf]
        %v1857 = vld [vmem:[%s5 + $0x1f4] sm:$0xf]
        %v1858 = vld [vmem:[%s5 + $0x1f8] sm:$0xf]
        %v1859 = vld [vmem:[%s5 + $0x1fc] sm:$0xf]
        %v1860 = vld [vmem:[%s5 + $0x200] sm:$0xf]
        %v1861 = vld [vmem:[%s5 + $0x204] sm:$0xf]
        %v1862 = vld [vmem:[%s5 + $0x208] sm:$0xf]
        %v1863 = vld [vmem:[%s5 + $0x20c] sm:$0xf]
        %v1864 = vld [vmem:[%s5 + $0x210] sm:$0xf]
        %v1865 = vld [vmem:[%s5 + $0x214] sm:$0xf]
        %v1866 = vld [vmem:[%s5 + $0x218] sm:$0xf]
        %v1867 = vld [vmem:[%s5 + $0x21c] sm:$0xf]
        %v1868 = vld [vmem:[%s5 + $0x220] sm:$0xf]
        %v1869 = vld [vmem:[%s5 + $0x224] sm:$0xf]
        %v1870 = vld [vmem:[%s5 + $0x228] sm:$0xf]
        %v1871 = vld [vmem:[%s5 + $0x22c] sm:$0xf]
        %v1872 = vld [vmem:[%s5 + $0x230] sm:$0xf]
        %v1873 = vld [vmem:[%s5 + $0x234] sm:$0xf]
        %v1874 = vld [vmem:[%s5 + $0x238] sm:$0xf]
        %v1875 = vld [vmem:[%s5 + $0x23c] sm:$0xf]
        %v1876 = vld [vmem:[%s5 + $0x240] sm:$0xf]
        %v1877 = vld [vmem:[%s5 + $0x244] sm:$0xf]
        %v1878 = vld [vmem:[%s5 + $0x248] sm:$0xf]
        %v1879 = vld [vmem:[%s5 + $0x24c] sm:$0xf]
        %v1880 = vld [vmem:[%s5 + $0x250] sm:$0xf]
        %v1881 = vld [vmem:[%s5 + $0x254] sm:$0xf]
        %v1882 = vld [vmem:[%s5 + $0x258] sm:$0xf]
        %v1883 = vld [vmem:[%s5 + $0x25c] sm:$0xf]
        %v1884 = vld [vmem:[%s5 + $0x260] sm:$0xf]
        %v1885 = vld [vmem:[%s5 + $0x264] sm:$0xf]
        %v1886 = vld [vmem:[%s5 + $0x268] sm:$0xf]
        %v1887 = vld [vmem:[%s5 + $0x26c] sm:$0xf]
        %v1888 = vld [vmem:[%s5 + $0x270] sm:$0xf]
        %v1889 = vld [vmem:[%s5 + $0x274] sm:$0xf]
        %v1890 = vld [vmem:[%s5 + $0x278] sm:$0xf]
        %v1891 = vld [vmem:[%s5 + $0x27c] sm:$0xf]
        %v1892 = vld [vmem:[%s6] sm:$0x1]
        %v2053 = vunpack.c.l.b16 %v1732
        %v2054 = vunpack.c.l.b16 %v1733
        %v2055 = vunpack.c.l.b16 %v1734
        %v2056 = vunpack.c.l.b16 %v1735
        %v2057 = vunpack.c.l.b16 %v1736
        %v2058 = vunpack.c.l.b16 %v1737
        %v2059 = vunpack.c.l.b16 %v1738
        %v2060 = vunpack.c.l.b16 %v1739
        %v2061 = vunpack.c.l.b16 %v1740
        %v2062 = vunpack.c.l.b16 %v1741
        %v2063 = vunpack.c.l.b16 %v1742
        %v2064 = vunpack.c.l.b16 %v1743
        %v2065 = vunpack.c.l.b16 %v1744
        %v2066 = vunpack.c.l.b16 %v1745
        %v2067 = vunpack.c.l.b16 %v1746
        %v2068 = vunpack.c.l.b16 %v1747
        %v2069 = vunpack.c.l.b16 %v1748
        %v2070 = vunpack.c.l.b16 %v1749
        %v2071 = vunpack.c.l.b16 %v1750
        %v2072 = vunpack.c.l.b16 %v1751
        %v2073 = vunpack.c.l.b16 %v1752
        %v2074 = vunpack.c.l.b16 %v1753
        %v2075 = vunpack.c.l.b16 %v1754
        %v2076 = vunpack.c.l.b16 %v1755
        %v2077 = vunpack.c.l.b16 %v1756
        %v2078 = vunpack.c.l.b16 %v1757
        %v2079 = vunpack.c.l.b16 %v1758
        %v2080 = vunpack.c.l.b16 %v1759
        %v2081 = vunpack.c.l.b16 %v1760
        %v2082 = vunpack.c.l.b16 %v1761
        %v2083 = vunpack.c.l.b16 %v1762
        %v2084 = vunpack.c.l.b16 %v1763
        %v2085 = vunpack.c.l.b16 %v1764
        %v2086 = vunpack.c.l.b16 %v1765
        %v2087 = vunpack.c.l.b16 %v1766
        %v2088 = vunpack.c.l.b16 %v1767
        %v2089 = vunpack.c.l.b16 %v1768
        %v2090 = vunpack.c.l.b16 %v1769
        %v2091 = vunpack.c.l.b16 %v1770
        %v2092 = vunpack.c.l.b16 %v1771
        %v2093 = vunpack.c.l.b16 %v1772
        %v2094 = vunpack.c.l.b16 %v1773
        %v2095 = vunpack.c.l.b16 %v1774
        %v2096 = vunpack.c.l.b16 %v1775
        %v2097 = vunpack.c.l.b16 %v1776
        %v2098 = vunpack.c.l.b16 %v1777
        %v2099 = vunpack.c.l.b16 %v1778
        %v2100 = vunpack.c.l.b16 %v1779
        %v2101 = vunpack.c.l.b16 %v1780
        %v2102 = vunpack.c.l.b16 %v1781
        %v2103 = vunpack.c.l.b16 %v1782
        %v2104 = vunpack.c.l.b16 %v1783
        %v2105 = vunpack.c.l.b16 %v1784
        %v2106 = vunpack.c.l.b16 %v1785
        %v2107 = vunpack.c.l.b16 %v1786
        %v2108 = vunpack.c.l.b16 %v1787
        %v2109 = vunpack.c.l.b16 %v1788
        %v2110 = vunpack.c.l.b16 %v1789
        %v2111 = vunpack.c.l.b16 %v1790
        %v2112 = vunpack.c.l.b16 %v1791
        %v2113 = vunpack.c.l.b16 %v1792
        %v2114 = vunpack.c.l.b16 %v1793
        %v2115 = vunpack.c.l.b16 %v1794
        %v2116 = vunpack.c.l.b16 %v1795
        %v2117 = vunpack.c.l.b16 %v1796
        %v2118 = vunpack.c.l.b16 %v1797
        %v2119 = vunpack.c.l.b16 %v1798
        %v2120 = vunpack.c.l.b16 %v1799
        %v2121 = vunpack.c.l.b16 %v1800
        %v2122 = vunpack.c.l.b16 %v1801
        %v2123 = vunpack.c.l.b16 %v1802
        %v2124 = vunpack.c.l.b16 %v1803
        %v2125 = vunpack.c.l.b16 %v1804
        %v2126 = vunpack.c.l.b16 %v1805
        %v2127 = vunpack.c.l.b16 %v1806
        %v2128 = vunpack.c.l.b16 %v1807
        %v2129 = vunpack.c.l.b16 %v1808
        %v2130 = vunpack.c.l.b16 %v1809
        %v2131 = vunpack.c.l.b16 %v1810
        %v2132 = vunpack.c.l.b16 %v1811
        %v2133 = vunpack.c.l.b16 %v1812
        %v2134 = vunpack.c.l.b16 %v1813
        %v2135 = vunpack.c.l.b16 %v1814
        %v2136 = vunpack.c.l.b16 %v1815
        %v2137 = vunpack.c.l.b16 %v1816
        %v2138 = vunpack.c.l.b16 %v1817
        %v2139 = vunpack.c.l.b16 %v1818
        %v2140 = vunpack.c.l.b16 %v1819
        %v2141 = vunpack.c.l.b16 %v1820
        %v2142 = vunpack.c.l.b16 %v1821
        %v2143 = vunpack.c.l.b16 %v1822
        %v2144 = vunpack.c.l.b16 %v1823
        %v2145 = vunpack.c.l.b16 %v1824
        %v2146 = vunpack.c.l.b16 %v1825
        %v2147 = vunpack.c.l.b16 %v1826
        %v2148 = vunpack.c.l.b16 %v1827
        %v2149 = vunpack.c.l.b16 %v1828
        %v2150 = vunpack.c.l.b16 %v1829
        %v2151 = vunpack.c.l.b16 %v1830
        %v2152 = vunpack.c.l.b16 %v1831
        %v2153 = vunpack.c.l.b16 %v1832
        %v2154 = vunpack.c.l.b16 %v1833
        %v2155 = vunpack.c.l.b16 %v1834
        %v2156 = vunpack.c.l.b16 %v1835
        %v2157 = vunpack.c.l.b16 %v1836
        %v2158 = vunpack.c.l.b16 %v1837
        %v2159 = vunpack.c.l.b16 %v1838
        %v2160 = vunpack.c.l.b16 %v1839
        %v2161 = vunpack.c.l.b16 %v1840
        %v2162 = vunpack.c.l.b16 %v1841
        %v2163 = vunpack.c.l.b16 %v1842
        %v2164 = vunpack.c.l.b16 %v1843
        %v2165 = vunpack.c.l.b16 %v1844
        %v2166 = vunpack.c.l.b16 %v1845
        %v2167 = vunpack.c.l.b16 %v1846
        %v2168 = vunpack.c.l.b16 %v1847
        %v2169 = vunpack.c.l.b16 %v1848
        %v2170 = vunpack.c.l.b16 %v1849
        %v2171 = vunpack.c.l.b16 %v1850
        %v2172 = vunpack.c.l.b16 %v1851
        %v2173 = vunpack.c.l.b16 %v1852
        %v2174 = vunpack.c.l.b16 %v1853
        %v2175 = vunpack.c.l.b16 %v1854
        %v2176 = vunpack.c.l.b16 %v1855
        %v2177 = vunpack.c.l.b16 %v1856
        %v2178 = vunpack.c.l.b16 %v1857
        %v2179 = vunpack.c.l.b16 %v1858
        %v2180 = vunpack.c.l.b16 %v1859
        %v2181 = vunpack.c.l.b16 %v1860
        %v2182 = vunpack.c.l.b16 %v1861
        %v2183 = vunpack.c.l.b16 %v1862
        %v2184 = vunpack.c.l.b16 %v1863
        %v2185 = vunpack.c.l.b16 %v1864
        %v2186 = vunpack.c.l.b16 %v1865
        %v2187 = vunpack.c.l.b16 %v1866
        %v2188 = vunpack.c.l.b16 %v1867
        %v2189 = vunpack.c.l.b16 %v1868
        %v2190 = vunpack.c.l.b16 %v1869
        %v2191 = vunpack.c.l.b16 %v1870
        %v2192 = vunpack.c.l.b16 %v1871
        %v2193 = vunpack.c.l.b16 %v1872
        %v2194 = vunpack.c.l.b16 %v1873
        %v2195 = vunpack.c.l.b16 %v1874
        %v2196 = vunpack.c.l.b16 %v1875
        %v2197 = vunpack.c.l.b16 %v1876
        %v2198 = vunpack.c.l.b16 %v1877
        %v2199 = vunpack.c.l.b16 %v1878
        %v2200 = vunpack.c.l.b16 %v1879
        %v2201 = vunpack.c.l.b16 %v1880
        %v2202 = vunpack.c.l.b16 %v1881
        %v2203 = vunpack.c.l.b16 %v1882
        %v2204 = vunpack.c.l.b16 %v1883
        %v2205 = vunpack.c.l.b16 %v1884
        %v2206 = vunpack.c.l.b16 %v1885
        %v2207 = vunpack.c.l.b16 %v1886
        %v2208 = vunpack.c.l.b16 %v1887
        %v2209 = vunpack.c.l.b16 %v1888
        %v2210 = vunpack.c.l.b16 %v1889
        %v2211 = vunpack.c.l.b16 %v1890
        %v2212 = vunpack.c.l.b16 %v1891
        %v2213 = vpack.c.b16 %v2054, %v2053
        %v2214 = vpack.c.b16 %v2056, %v2055
        %v2215 = vpack.c.b16 %v2058, %v2057
        %v2216 = vpack.c.b16 %v2060, %v2059
        %v2217 = vpack.c.b16 %v2062, %v2061
        %v2218 = vpack.c.b16 %v2064, %v2063
        %v2219 = vpack.c.b16 %v2066, %v2065
        %v2220 = vpack.c.b16 %v2068, %v2067
        %v2221 = vpack.c.b16 %v2070, %v2069
        %v2222 = vpack.c.b16 %v2072, %v2071
        %v2223 = vpack.c.b16 %v2074, %v2073
        %v2224 = vpack.c.b16 %v2076, %v2075
        %v2225 = vpack.c.b16 %v2078, %v2077
        %v2226 = vpack.c.b16 %v2080, %v2079
        %v2227 = vpack.c.b16 %v2082, %v2081
        %v2228 = vpack.c.b16 %v2084, %v2083
        %v2229 = vpack.c.b16 %v2086, %v2085
        %v2230 = vpack.c.b16 %v2088, %v2087
        %v2231 = vpack.c.b16 %v2090, %v2089
        %v2232 = vpack.c.b16 %v2092, %v2091
        %v2233 = vpack.c.b16 %v2094, %v2093
        %v2234 = vpack.c.b16 %v2096, %v2095
        %v2235 = vpack.c.b16 %v2098, %v2097
        %v2236 = vpack.c.b16 %v2100, %v2099
        %v2237 = vpack.c.b16 %v2102, %v2101
        %v2238 = vpack.c.b16 %v2104, %v2103
        %v2239 = vpack.c.b16 %v2106, %v2105
        %v2240 = vpack.c.b16 %v2108, %v2107
        %v2241 = vpack.c.b16 %v2110, %v2109
        %v2242 = vpack.c.b16 %v2112, %v2111
        %v2243 = vpack.c.b16 %v2114, %v2113
        %v2244 = vpack.c.b16 %v2116, %v2115
        %v2245 = vpack.c.b16 %v2118, %v2117
        %v2246 = vpack.c.b16 %v2120, %v2119
        %v2247 = vpack.c.b16 %v2122, %v2121
        %v2248 = vpack.c.b16 %v2124, %v2123
        %v2249 = vpack.c.b16 %v2126, %v2125
        %v2250 = vpack.c.b16 %v2128, %v2127
        %v2251 = vpack.c.b16 %v2130, %v2129
        %v2252 = vpack.c.b16 %v2132, %v2131
        %v2253 = vpack.c.b16 %v2134, %v2133
        %v2254 = vpack.c.b16 %v2136, %v2135
        %v2255 = vpack.c.b16 %v2138, %v2137
        %v2256 = vpack.c.b16 %v2140, %v2139
        %v2257 = vpack.c.b16 %v2142, %v2141
        %v2258 = vpack.c.b16 %v2144, %v2143
        %v2259 = vpack.c.b16 %v2146, %v2145
        %v2260 = vpack.c.b16 %v2148, %v2147
        %v2261 = vpack.c.b16 %v2150, %v2149
        %v2262 = vpack.c.b16 %v2152, %v2151
        %v2263 = vpack.c.b16 %v2154, %v2153
        %v2264 = vpack.c.b16 %v2156, %v2155
        %v2265 = vpack.c.b16 %v2158, %v2157
        %v2266 = vpack.c.b16 %v2160, %v2159
        %v2267 = vpack.c.b16 %v2162, %v2161
        %v2268 = vpack.c.b16 %v2164, %v2163
        %v2269 = vpack.c.b16 %v2166, %v2165
        %v2270 = vpack.c.b16 %v2168, %v2167
        %v2271 = vpack.c.b16 %v2170, %v2169
        %v2272 = vpack.c.b16 %v2172, %v2171
        %v2273 = vpack.c.b16 %v2174, %v2173
        %v2274 = vpack.c.b16 %v2176, %v2175
        %v2275 = vpack.c.b16 %v2178, %v2177
        %v2276 = vpack.c.b16 %v2180, %v2179
        %v2277 = vpack.c.b16 %v2182, %v2181
        %v2278 = vpack.c.b16 %v2184, %v2183
        %v2279 = vpack.c.b16 %v2186, %v2185
        %v2280 = vpack.c.b16 %v2188, %v2187
        %v2281 = vpack.c.b16 %v2190, %v2189
        %v2282 = vpack.c.b16 %v2192, %v2191
        %v2283 = vpack.c.b16 %v2194, %v2193
        %v2284 = vpack.c.b16 %v2196, %v2195
        %v2285 = vpack.c.b16 %v2198, %v2197
        %v2286 = vpack.c.b16 %v2200, %v2199
        %v2287 = vpack.c.b16 %v2202, %v2201
        %v2288 = vpack.c.b16 %v2204, %v2203
        %v2289 = vpack.c.b16 %v2206, %v2205
        %v2290 = vpack.c.b16 %v2208, %v2207
        %v2291 = vpack.c.b16 %v2210, %v2209
        %v2292 = vpack.c.b16 %v2212, %v2211
        %2373 = vmatprep.subr.bf16.mxu0 0
        %2374 = vmatpush1.bf16.msra.mxu0 %v2213
        %2375 = vmatprep.subr.bf16.mxu0 0
        %2376 = vmatpush1.bf16.msra.mxu0 %v2214
        %2377 = vmatprep.subr.bf16.mxu0 0
        %2378 = vmatpush1.bf16.msra.mxu0 %v2215
        %2379 = vmatprep.subr.bf16.mxu0 0
        %2380 = vmatpush1.bf16.msra.mxu0 %v2216
        %2381 = vmatprep.subr.bf16.mxu0 0
        %2382 = vmatpush1.bf16.msra.mxu0 %v2217
        %2383 = vmatprep.subr.bf16.mxu0 0
        %2384 = vmatpush1.bf16.msra.mxu0 %v2218
        %2385 = vmatprep.subr.bf16.mxu0 0
        %2386 = vmatpush1.bf16.msra.mxu0 %v2219
        %2387 = vmatprep.subr.bf16.mxu0 0
        %2388 = vmatpush1.bf16.msra.mxu0 %v2220
        %2389 = vmatprep.subr.bf16.mxu0 0
        %2390 = vmatpush1.bf16.msra.mxu0 %v2221
        %2391 = vmatprep.subr.bf16.mxu0 0
        %2392 = vmatpush1.bf16.msra.mxu0 %v2222
        %2393 = vmatprep.subr.bf16.mxu0 0
        %2394 = vmatpush1.bf16.msra.mxu0 %v2223
        %2395 = vmatprep.subr.bf16.mxu0 0
        %2396 = vmatpush1.bf16.msra.mxu0 %v2224
        %2397 = vmatprep.subr.bf16.mxu0 0
        %2398 = vmatpush1.bf16.msra.mxu0 %v2225
        %2399 = vmatprep.subr.bf16.mxu0 0
        %2400 = vmatpush1.bf16.msra.mxu0 %v2226
        %2401 = vmatprep.subr.bf16.mxu0 0
        %2402 = vmatpush1.bf16.msra.mxu0 %v2227
        %2403 = vmatprep.subr.bf16.mxu0 0
        %2404 = vmatpush1.bf16.msra.mxu0 %v2228
        %2405 = vmatprep.mubr.bf16.mxu0 %v1723
        %2406 = vmatmul.mubr.bf16.gmra.mrb[0].mxu0 %v1722
        %v2407 = vpop.f32.mrb[0].mxu0
        %v2408 = vadd.f32 %v1892, %v2407
        %v2409 = vpop.f32.mrb[0].mxu0
        %v2410 = vpop.f32.mrb[0].mxu0
        %v2411 = vpop.f32.mrb[0].mxu0
        %2412 = vdwg.mxu0
        %2413 = vmatprep.subr.bf16.mxu0 0
        %2414 = vmatpush1.bf16.msra.mxu0 %v2229
        %2415 = vmatprep.subr.bf16.mxu0 0
        %2416 = vmatpush1.bf16.msra.mxu0 %v2230
        %2417 = vmatprep.subr.bf16.mxu0 0
        %2418 = vmatpush1.bf16.msra.mxu0 %v2231
        %2419 = vmatprep.subr.bf16.mxu0 0
        %2420 = vmatpush1.bf16.msra.mxu0 %v2232
        %2421 = vmatprep.subr.bf16.mxu0 0
        %2422 = vmatpush1.bf16.msra.mxu0 %v2233
        %2423 = vmatprep.subr.bf16.mxu0 0
        %2424 = vmatpush1.bf16.msra.mxu0 %v2234
        %2425 = vmatprep.subr.bf16.mxu0 0
        %2426 = vmatpush1.bf16.msra.mxu0 %v2235
        %2427 = vmatprep.subr.bf16.mxu0 0
        %2428 = vmatpush1.bf16.msra.mxu0 %v2236
        %2429 = vmatprep.subr.bf16.mxu0 0
        %2430 = vmatpush1.bf16.msra.mxu0 %v2237
        %2431 = vmatprep.subr.bf16.mxu0 0
        %2432 = vmatpush1.bf16.msra.mxu0 %v2238
        %2433 = vmatprep.subr.bf16.mxu0 0
        %2434 = vmatpush1.bf16.msra.mxu0 %v2239
        %2435 = vmatprep.subr.bf16.mxu0 0
        %2436 = vmatpush1.bf16.msra.mxu0 %v2240
        %2437 = vmatprep.subr.bf16.mxu0 0
        %2438 = vmatpush1.bf16.msra.mxu0 %v2241
        %2439 = vmatprep.subr.bf16.mxu0 0
        %2440 = vmatpush1.bf16.msra.mxu0 %v2242
        %2441 = vmatprep.subr.bf16.mxu0 0
        %2442 = vmatpush1.bf16.msra.mxu0 %v2243
        %2443 = vmatprep.subr.bf16.mxu0 0
        %2444 = vmatpush1.bf16.msra.mxu0 %v2244
        %2445 = vmatprep.mubr.bf16.mxu0 %v1725
        %2446 = vmatmul.mubr.bf16.gmra.mrb[0].mxu0 %v1724
        %v2447 = vpop.f32.mrb[0].mxu0
        %v2448 = vadd.f32 %v2408, %v2447
        %v2449 = vpop.f32.mrb[0].mxu0
        %v2450 = vpop.f32.mrb[0].mxu0
        %v2451 = vpop.f32.mrb[0].mxu0
        %2452 = vdwg.mxu0
        %2453 = vmatprep.subr.bf16.mxu0 0
        %2454 = vmatpush1.bf16.msra.mxu0 %v2245
        %2455 = vmatprep.subr.bf16.mxu0 0
        %2456 = vmatpush1.bf16.msra.mxu0 %v2246
        %2457 = vmatprep.subr.bf16.mxu0 0
        %2458 = vmatpush1.bf16.msra.mxu0 %v2247
        %2459 = vmatprep.subr.bf16.mxu0 0
        %2460 = vmatpush1.bf16.msra.mxu0 %v2248
        %2461 = vmatprep.subr.bf16.mxu0 0
        %2462 = vmatpush1.bf16.msra.mxu0 %v2249
        %2463 = vmatprep.subr.bf16.mxu0 0
        %2464 = vmatpush1.bf16.msra.mxu0 %v2250
        %2465 = vmatprep.subr.bf16.mxu0 0
        %2466 = vmatpush1.bf16.msra.mxu0 %v2251
        %2467 = vmatprep.subr.bf16.mxu0 0
        %2468 = vmatpush1.bf16.msra.mxu0 %v2252
        %2469 = vmatprep.subr.bf16.mxu0 0
        %2470 = vmatpush1.bf16.msra.mxu0 %v2253
        %2471 = vmatprep.subr.bf16.mxu0 0
        %2472 = vmatpush1.bf16.msra.mxu0 %v2254
        %2473 = vmatprep.subr.bf16.mxu0 0
        %2474 = vmatpush1.bf16.msra.mxu0 %v2255
        %2475 = vmatprep.subr.bf16.mxu0 0
        %2476 = vmatpush1.bf16.msra.mxu0 %v2256
        %2477 = vmatprep.subr.bf16.mxu0 0
        %2478 = vmatpush1.bf16.msra.mxu0 %v2257
        %2479 = vmatprep.subr.bf16.mxu0 0
        %2480 = vmatpush1.bf16.msra.mxu0 %v2258
        %2481 = vmatprep.subr.bf16.mxu0 0
        %2482 = vmatpush1.bf16.msra.mxu0 %v2259
        %2483 = vmatprep.subr.bf16.mxu0 0
        %2484 = vmatpush1.bf16.msra.mxu0 %v2260
        %2485 = vmatprep.mubr.bf16.mxu0 %v1727
        %2486 = vmatmul.mubr.bf16.gmra.mrb[0].mxu0 %v1726
        %v2487 = vpop.f32.mrb[0].mxu0
        %v2488 = vadd.f32 %v2448, %v2487
        %v2489 = vpop.f32.mrb[0].mxu0
        %v2490 = vpop.f32.mrb[0].mxu0
        %v2491 = vpop.f32.mrb[0].mxu0
        %2492 = vdwg.mxu0
        %2493 = vmatprep.subr.bf16.mxu0 0
        %2494 = vmatpush1.bf16.msra.mxu0 %v2261
        %2495 = vmatprep.subr.bf16.mxu0 0
        %2496 = vmatpush1.bf16.msra.mxu0 %v2262
        %2497 = vmatprep.subr.bf16.mxu0 0
        %2498 = vmatpush1.bf16.msra.mxu0 %v2263
        %2499 = vmatprep.subr.bf16.mxu0 0
        %2500 = vmatpush1.bf16.msra.mxu0 %v2264
        %2501 = vmatprep.subr.bf16.mxu0 0
        %2502 = vmatpush1.bf16.msra.mxu0 %v2265
        %2503 = vmatprep.subr.bf16.mxu0 0
        %2504 = vmatpush1.bf16.msra.mxu0 %v2266
        %2505 = vmatprep.subr.bf16.mxu0 0
        %2506 = vmatpush1.bf16.msra.mxu0 %v2267
        %2507 = vmatprep.subr.bf16.mxu0 0
        %2508 = vmatpush1.bf16.msra.mxu0 %v2268
        %2509 = vmatprep.subr.bf16.mxu0 0
        %2510 = vmatpush1.bf16.msra.mxu0 %v2269
        %2511 = vmatprep.subr.bf16.mxu0 0
        %2512 = vmatpush1.bf16.msra.mxu0 %v2270
        %2513 = vmatprep.subr.bf16.mxu0 0
        %2514 = vmatpush1.bf16.msra.mxu0 %v2271
        %2515 = vmatprep.subr.bf16.mxu0 0
        %2516 = vmatpush1.bf16.msra.mxu0 %v2272
        %2517 = vmatprep.subr.bf16.mxu0 0
        %2518 = vmatpush1.bf16.msra.mxu0 %v2273
        %2519 = vmatprep.subr.bf16.mxu0 0
        %2520 = vmatpush1.bf16.msra.mxu0 %v2274
        %2521 = vmatprep.subr.bf16.mxu0 0
        %2522 = vmatpush1.bf16.msra.mxu0 %v2275
        %2523 = vmatprep.subr.bf16.mxu0 0
        %2524 = vmatpush1.bf16.msra.mxu0 %v2276
        %2525 = vmatprep.mubr.bf16.mxu0 %v1729
        %2526 = vmatmul.mubr.bf16.gmra.mrb[0].mxu0 %v1728
        %v2527 = vpop.f32.mrb[0].mxu0
        %v2528 = vadd.f32 %v2488, %v2527
        %v2529 = vpop.f32.mrb[0].mxu0
        %v2530 = vpop.f32.mrb[0].mxu0
        %v2531 = vpop.f32.mrb[0].mxu0
        %2532 = vdwg.mxu0
        %2533 = vmatprep.subr.bf16.mxu0 0
        %2534 = vmatpush1.bf16.msra.mxu0 %v2277
        %2535 = vmatprep.subr.bf16.mxu0 0
        %2536 = vmatpush1.bf16.msra.mxu0 %v2278
        %2537 = vmatprep.subr.bf16.mxu0 0
        %2538 = vmatpush1.bf16.msra.mxu0 %v2279
        %2539 = vmatprep.subr.bf16.mxu0 0
        %2540 = vmatpush1.bf16.msra.mxu0 %v2280
        %2541 = vmatprep.subr.bf16.mxu0 0
        %2542 = vmatpush1.bf16.msra.mxu0 %v2281
        %2543 = vmatprep.subr.bf16.mxu0 0
        %2544 = vmatpush1.bf16.msra.mxu0 %v2282
        %2545 = vmatprep.subr.bf16.mxu0 0
        %2546 = vmatpush1.bf16.msra.mxu0 %v2283
        %2547 = vmatprep.subr.bf16.mxu0 0
        %2548 = vmatpush1.bf16.msra.mxu0 %v2284
        %2549 = vmatprep.subr.bf16.mxu0 0
        %2550 = vmatpush1.bf16.msra.mxu0 %v2285
        %2551 = vmatprep.subr.bf16.mxu0 0
        %2552 = vmatpush1.bf16.msra.mxu0 %v2286
        %2553 = vmatprep.subr.bf16.mxu0 0
        %2554 = vmatpush1.bf16.msra.mxu0 %v2287
        %2555 = vmatprep.subr.bf16.mxu0 0
        %2556 = vmatpush1.bf16.msra.mxu0 %v2288
        %2557 = vmatprep.subr.bf16.mxu0 0
        %2558 = vmatpush1.bf16.msra.mxu0 %v2289
        %2559 = vmatprep.subr.bf16.mxu0 0
        %2560 = vmatpush1.bf16.msra.mxu0 %v2290
        %2561 = vmatprep.subr.bf16.mxu0 0
        %2562 = vmatpush1.bf16.msra.mxu0 %v2291
        %2563 = vmatprep.subr.bf16.mxu0 0
        %2564 = vmatpush1.bf16.msra.mxu0 %v2292
        %2565 = vmatprep.mubr.bf16.mxu0 %v1731
        %2566 = vmatmul.mubr.bf16.gmra.mrb[0].mxu0 %v1730
        %v2567 = vpop.f32.mrb[0].mxu0
        %v2568 = vadd.f32 %v2528, %v2567
        %v2569 = vpop.f32.mrb[0].mxu0
        %v2570 = vpop.f32.mrb[0].mxu0
        %v2571 = vpop.f32.mrb[0].mxu0
        %2572 = vdwg.mxu0
        %2573 = vst [vmem:[%s302] sm:$0x1] %v2568
      $region56: #{pretrain_model_forward.2} parent=47 // pred_fallthru
        _
      %p2574 = scmp.lt.s32.totalorder %s22, 3
      %s2575 = scalar_select %p2574, %s22, 3
      %s2576 = scalar_lea.vmem %s7, %s2575
      // Predicated region
      $region57: #{pretrain_model_forward.2} parent=47 // pred_check
        %p2577 = pneg %p202
      $region58: #{pretrain_model_forward.2} parent=47 // pred_check_branch
        %2579 = sbr.rel (%p2577) target = $region60
      $region59: #{pretrain_model_forward.2} parent=47 // pred_region
        _
      $region60: #{pretrain_model_forward.2} parent=47 // pred_fallthru
        _
    $region48: #{pretrain_model_forward.2} parent=5 // pred_fallthru
      _
    %p2580 = scmp.le.s32.totalorder 2, %s13
    // Predicated region
    $region61: #{pretrain_model_forward.2} parent=5 // pred_check
      %p2581 = pneg %p2580
    $region62: #{pretrain_model_forward.2} parent=5 // pred_check_branch
      %2583 = sbr.rel (%p2581) target = $region64
    $region63: #{pretrain_model_forward.2} parent=5 // pred_region
      %s2584 = ssub.s32 %s13, 2
      // Predicated region
      $region65: #{pretrain_model_forward.2} parent=63 // pred_check
        %p2585 = pneg %p208
      $region66: #{pretrain_model_forward.2} parent=63 // pred_check_branch
        %2587 = sbr.rel (%p2585) target = $region68
      $region67: #{pretrain_model_forward.2} parent=63 // pred_region
        %p2588 = scmp.lt.s32.totalorder %s24, 3
        %s2589 = scalar_select %p2588, %s24, 3
        %s2590 = scalar_lea.vmem %s7, %s2589
      $region68: #{pretrain_model_forward.2} parent=63 // pred_fallthru
        _
    $region64: #{pretrain_model_forward.2} parent=5 // pred_fallthru
      _
  $region6: #{pretrain_model_forward.2} parent=0 // loop_footer
    %s17 = sadd.s32 1, %s13
  $region7: #{pretrain_model_forward.2} parent=0 // loop_footer_branch
    %12 = sbr.rel target = $region3
  $region8: #{pretrain_model_forward.2} parent=0 // loop_exit
    _

</llo_original>
